<compile_context>
chip_gen: v6e
topology: v6e:2x2x1
jax: 0.10.0
libtpu: 0.0.40
codegen_flags: <defaults>
</compile_context>

<pallas_src>
import numpy as np
import jax
import jax.numpy as jnp
from jax.experimental import pallas as pl
from jax.experimental.pallas import tpu as pltpu

_TWO_PI = 2.0 * np.pi


def _rff_kernel(x_ref, w2pi_ref, o_ref):
    # x_ref: (TB, 1) f32, w2pi_ref: (1, H) f32 (weights pre-scaled by 2*pi),
    # o_ref: (TB, 2*H) f32 laid out as [sin | cos] along the lane axis.
    H = w2pi_ref.shape[-1]
    # Broadcast outer product on the VPU.
    proj = x_ref[...] * w2pi_ref[...]          # (TB, H)
    # Split stores instead of a concatenate: no cross-lane shuffle and the
    # sin/cos tiles are not live simultaneously.
    o_ref[:, :H] = jnp.sin(proj)
    o_ref[:, H:] = jnp.cos(proj)


def gaussian_rff(x, rff_weights, *, block_b=1024):
    """x: (B,) float; rff_weights: (H,) float -> (B, 2*H) float32."""
    B = x.shape[0]
    H = rff_weights.shape[0]

    # Fold the 2*pi scalar into the weight row once (B x cheaper than scaling
    # the full (B, H) projection inside the kernel).
    w2pi = (rff_weights.astype(jnp.float32) * _TWO_PI).reshape(1, H)

    # Tile over B so the pipeline double-buffers HBM traffic against compute.
    TB = min(block_b, B)
    TB = max(8, -(-TB // 8) * 8)          # sublane-aligned tile (multiple of 8)
    Bp = -(-B // TB) * TB                  # pad B up to a whole number of tiles

    x2 = x.astype(jnp.float32).reshape(B, 1)
    if Bp != B:
        x2 = jnp.pad(x2, ((0, Bp - B), (0, 0)))

    out = pl.pallas_call(
        _rff_kernel,
        out_shape=jax.ShapeDtypeStruct((Bp, 2 * H), jnp.float32),
        grid_spec=pltpu.PrefetchScalarGridSpec(
            num_scalar_prefetch=0,
            grid=(pl.cdiv(Bp, TB),),
            in_specs=[
                pl.BlockSpec((TB, 1), lambda i: (i, 0)),   # x tile, marches over B
                pl.BlockSpec((1, H), lambda i: (0, 0)),    # weights, grid-invariant
            ],
            out_specs=pl.BlockSpec((TB, 2 * H), lambda i: (i, 0)),
        ),
        compiler_params=pltpu.CompilerParams(
            # B-tiles are independent -> shard across TensorCores (v7x megacore).
            dimension_semantics=("parallel",),
        ),
    )(x2, w2pi)

    if Bp != B:
        out = out[:B]
    return out


if __name__ == "__main__":
    # Production-like time-embedding size: H = 128 -> output lane dim 256
    # (multiple of 128, so stores are unmasked / lane-dense).
    embed_dim = 256
    scale = 30.0
    batch = 64

    key = jax.random.PRNGKey(0)
    kw, kx = jax.random.split(key)

    # Matches torch.randn(embed_dim // 2) * scale (fixed, non-trainable).
    rff_weights = jax.random.normal(kw, (embed_dim // 2,), dtype=jnp.float32) * scale
    # Diffusion-style time steps in (0, 1].
    x = jax.random.uniform(kx, (batch,), dtype=jnp.float32)

    out = jax.block_until_ready(gaussian_rff(x, rff_weights))
    assert out.shape == (batch, embed_dim)

    # Reference A: same FP ordering as the kernel (2*pi folded into the
    # weights) -> tight agreement expected.
    w2pi = rff_weights * _TWO_PI
    proj_a = x[:, None] * w2pi[None, :]
    ref_a = jnp.concatenate([jnp.sin(proj_a), jnp.cos(proj_a)], axis=-1)
    np.testing.assert_allclose(np.asarray(out), np.asarray(ref_a),
                               atol=5e-5, rtol=5e-5)

    # Reference B: literal PyTorch ordering x * w * 2*pi. Folding 2*pi into
    # the weights changes FP associativity; with |proj| up to a few hundred
    # radians a 1-2 ulp argument difference moves sin/cos by up to ~2e-4, so
    # the tolerance here is intentionally looser.
    proj_b = x[:, None] * rff_weights[None, :] * 2.0 * np.pi
    ref_b = jnp.concatenate([jnp.sin(proj_b), jnp.cos(proj_b)], axis=-1)
    np.testing.assert_allclose(np.asarray(out), np.asarray(ref_b),
                               atol=5e-4, rtol=5e-4)

    print("KERNEL_OK")
</pallas_src>

<mosaic_0001>
module attributes {stable_mosaic.version = 11 : i64} {
  func.func @_rff_kernel(%arg0: i32, %arg1: memref<64x1xf32, #tpu.memory_space<vmem>>, %arg2: memref<1x128xf32, #tpu.memory_space<vmem>>, %arg3: memref<64x256xf32, #tpu.memory_space<vmem>>) attributes {dimension_semantics = [#tpu.dimension_semantics<parallel>], iteration_bounds = array<i64: 1>, scalar_prefetch = 0 : i64, scratch_operands = 0 : i64, tpu.core_type = #tpu.core_type<tc>, window_params = [{transform_indices = @transform_0, window_bounds = array<i64: 64, 1>}, {pipeline_mode = #tpu.pipeline_mode<synchronous>, transform_indices = @transform_1, window_bounds = array<i64: 1, 128>}, {transform_indices = @transform_2, window_bounds = array<i64: 64, 256>}]} {
    %c0 = arith.constant 0 : index
    %c0_0 = arith.constant 0 : index
    %0 = vector.load %arg1[%c0, %c0_0] : memref<64x1xf32, #tpu.memory_space<vmem>>, vector<64x1xf32>
    %c0_1 = arith.constant 0 : index
    %c0_2 = arith.constant 0 : index
    %1 = vector.load %arg2[%c0_1, %c0_2] : memref<1x128xf32, #tpu.memory_space<vmem>>, vector<1x128xf32>
    %2 = vector.broadcast %0 : vector<64x1xf32> to vector<64x128xf32>
    %3 = vector.broadcast %1 : vector<1x128xf32> to vector<64x128xf32>
    %4 = arith.mulf %2, %3 : vector<64x128xf32>
    %5 = math.sin %4 : vector<64x128xf32>
    %c0_3 = arith.constant 0 : index
    %c0_4 = arith.constant 0 : index
    %6 = vector.load %arg3[%c0_3, %c0_4] : memref<64x256xf32, #tpu.memory_space<vmem>>, vector<64x128xf32>
    tpu.vector_store %arg3[%c0_3, %c0_4], %5 {strides = array<i32>} : memref<64x256xf32, #tpu.memory_space<vmem>>, vector<64x128xf32>,
    %7 = math.cos %4 : vector<64x128xf32>
    %c0_5 = arith.constant 0 : index
    %c128 = arith.constant 128 : index
    %8 = vector.load %arg3[%c0_5, %c128] : memref<64x256xf32, #tpu.memory_space<vmem>>, vector<64x128xf32>
    tpu.vector_store %arg3[%c0_5, %c128], %7 {strides = array<i32>} : memref<64x256xf32, #tpu.memory_space<vmem>>, vector<64x128xf32>,
    return
  }
  func.func @transform_0(%arg0: i32) -> (i32, i32) {
    %c0_i32 = arith.constant 0 : i32
    %c0_i32_0 = arith.constant 0 : i32
    return %arg0, %c0_i32 : i32, i32
  }
  func.func @transform_1(%arg0: i32) -> (i32, i32) {
    %c0_i32 = arith.constant 0 : i32
    %c0_i32_0 = arith.constant 0 : i32
    %c0_i32_1 = arith.constant 0 : i32
    return %c0_i32, %c0_i32_0 : i32, i32
  }
  func.func @transform_2(%arg0: i32) -> (i32, i32) {
    %c0_i32 = arith.constant 0 : i32
    %c0_i32_0 = arith.constant 0 : i32
    return %arg0, %c0_i32 : i32, i32
  }
}

</mosaic_0001>

<llo_original>
// kernel: tpu_custom_call.1
$region0: #{tpu_custom_call.1}
  #allocation0 [shape = 'u32[]', space=smem, size = 0x4, offset = 0x4, fixed_abs, tag = 'smem constant byte address 0x4 - core index']
  #allocation1 [shape = 'u32[144,128]{1,0:T(1,128)}', space=vmem, size = 0x12000, scoped, tag = 'internal scratch']
  %s0 = inlined_call_operand.vmem [shape: f32[64,1], index: 0, kind: input, shape index: {}]
  %s1 = inlined_call_operand.vmem [shape: f32[1,128], index: 1, kind: input, shape index: {}]
  %s2 = inlined_call_operand.hbm [shape: f32[64,256], index: 2, kind: output, shape index: {}]
  %s3 = sld [smem:[#allocation0]]
  $region18: #{tpu_custom_call.1} parent=0
    _
  %s5 = ssub.s32 1, %s3
  %s6 = scalar_select 0, %s5, %s3
  $region1: #{tpu_custom_call.1} parent=0
    #allocation2 [shape = 'u8[65536]{0}', space=vmem, size = 0x10000, scoped, tag = 'output window, operand 0, single buffered']
    #allocation3 [shape = 's32[1]{0}', space=sflag, size = 0x4, scoped, tag = 'scoped memory for tpu_custom_call.1']
    %7 = vsyncpa [#allocation3], 0
    // Predicated region
    $region2: #{tpu_custom_call.1} parent=1 // pred_check
      _
    $region3: #{tpu_custom_call.1} parent=1 // pred_check_branch
      %9 = sbr.rel (0) target = $region5
    $region4: #{tpu_custom_call.1} parent=1 // pred_region
      _
    $region5: #{tpu_custom_call.1} parent=1 // pred_fallthru
      _
    // Predicated region
    $region6: #{tpu_custom_call.1} parent=1 // pred_check
      _
    $region7: #{tpu_custom_call.1} parent=1 // pred_check_branch
      %11 = sbr.rel (0) target = $region9
    $region8: #{tpu_custom_call.1} parent=1 // pred_region
      _
    $region9: #{tpu_custom_call.1} parent=1 // pred_fallthru
      _
    %v12 = vld [vmem:[%s0] sm:$0xff]
    %v13 = vld [vmem:[%s0 + $0x8] sm:$0xff]
    %v14 = vld [vmem:[%s0 + $0x10] sm:$0xff]
    %v15 = vld [vmem:[%s0 + $0x18] sm:$0xff]
    %v16 = vld [vmem:[%s0 + $0x20] sm:$0xff]
    %v17 = vld [vmem:[%s0 + $0x28] sm:$0xff]
    %v18 = vld [vmem:[%s0 + $0x30] sm:$0xff]
    %v19 = vld [vmem:[%s0 + $0x38] sm:$0xff]
    %v20 = vld [vmem:[%s1] sm:$0x1]
    %22 = vset.pattern.permute.xlu0 0
    %23 = vperm.xlu0 %22, %v12
    %v24 = vpop.permute.xlu0 %23
    %27 = vset.pattern.permute.xlu0 0
    %28 = vperm.xlu0 %27, %v13
    %v29 = vpop.permute.xlu0 %28
    %32 = vset.pattern.permute.xlu0 0
    %33 = vperm.xlu0 %32, %v14
    %v34 = vpop.permute.xlu0 %33
    %37 = vset.pattern.permute.xlu0 0
    %38 = vperm.xlu0 %37, %v15
    %v39 = vpop.permute.xlu0 %38
    %42 = vset.pattern.permute.xlu0 0
    %43 = vperm.xlu0 %42, %v16
    %v44 = vpop.permute.xlu0 %43
    %47 = vset.pattern.permute.xlu0 0
    %48 = vperm.xlu0 %47, %v17
    %v49 = vpop.permute.xlu0 %48
    %52 = vset.pattern.permute.xlu0 0
    %53 = vperm.xlu0 %52, %v18
    %v54 = vpop.permute.xlu0 %53
    %57 = vset.pattern.permute.xlu0 0
    %58 = vperm.xlu0 %57, %v19
    %v59 = vpop.permute.xlu0 %58
    %v62 = vlaneseq
    %v63 = vshrl.u32 %v62, 7
    %v64 = vsub.s32 0, %v63
    %v65 = vrot.slane %v20, %v64
    %v67 = vmul.f32 %v24, %v65
    %v68 = vmul.f32 %v29, %v65
    %v69 = vmul.f32 %v34, %v65
    %v70 = vmul.f32 %v39, %v65
    %v71 = vmul.f32 %v44, %v65
    %v72 = vmul.f32 %v49, %v65
    %v73 = vmul.f32 %v54, %v65
    %v74 = vmul.f32 %v59, %v65
    %v75 = vand.u32 2147483647, %v67
    %vm76 = vcmp.le.f32.partialorder %v75, 0.7853982
    %vm77 = vcmp.lt.s32.totalorder %v67, 0
    %v78 = vand.u32 %v67, 2139095040
    %v79 = vshrl.u32 %v78, 23
    %v80 = vsub.s32 %v79, 127
    %v81 = vand.u32 2147483647, %v67
    %v82 = vand.u32 %v81, 8388607
    %v83 = vor.u32 %v82, 8388608
    %v84 = vsub.s32 0, %v83
    %v85 = vadd.s32 %v80, 1
    %vm86 = vcmp.gt.s32.totalorder %v85, 0
    %v87 = vsel %vm86, %v85, 0
    %v88 = vshrl.u32 %v87, 5
    %v89 = vand.u32 %v87, 31
    %v90 = vsub.s32 32, %v89
    %v91 = vshrl.u32 683565275, %v90
    %v92 = vshll.u32 683565275, %v89
    %v93 = vshrl.u32 2475754826, %v90
    %v94 = vor.u32 %v92, %v93
    %v95 = vshll.u32 2475754826, %v89
    %v96 = vshrl.u32 2131351028, %v90
    %v97 = vor.u32 %v95, %v96
    %v98 = vshll.u32 2131351028, %v89
    %v99 = vshrl.u32 2102212464, %v90
    %v100 = vor.u32 %v98, %v99
    %v101 = vshll.u32 2102212464, %v89
    %v102 = vshrl.u32 920167782, %v90
    %v103 = vor.u32 %v101, %v102
    %v104 = vshll.u32 920167782, %v89
    %v105 = vshrl.u32 1326507024, %v90
    %v106 = vor.u32 %v104, %v105
    %vm107 = vcmp.lt.s32.totalorder %v88, 1
    %vm108 = vcmp.lt.s32.totalorder %v88, 2
    %vm109 = vcmp.lt.s32.totalorder %v88, 3
    %vm110 = vcmp.lt.s32.totalorder %v88, 4
    %v111 = vsel %vm107, %v91, %v94
    %v112 = vsel %vm110, %v100, 2102212464
    %v113 = vsel %vm109, %v97, %v112
    %v114 = vsel %vm108, %v111, %v113
    %v115 = vsel %vm107, %v94, %v97
    %v116 = vsel %vm110, %v103, 920167782
    %v117 = vsel %vm109, %v100, %v116
    %v118 = vsel %vm108, %v115, %v117
    %v119 = vsel %vm107, %v97, %v100
    %v120 = vsel %vm110, %v106, 1326507024
    %v121 = vsel %vm109, %v103, %v120
    %v122 = vsel %vm108, %v119, %v121
    %v123 = vshll.u32 %v83, 8
    %v124 = vmul.u32.u64.compose %v123, %v122
    %v125 = vextract.low.u32 %v124
    %v126 = vextract.high.u32 %v124
    %v127 = vmul.u32.u64.compose %v123, %v118
    %v128 = vextract.low.u32 %v127
    %v129 = vextract.high.u32 %v127
    %v130 = vmul.u32 %v123, %v114
    %v131 = vadd.s32 %v126, %v128
    %vm132 = vc.u32 %v126, %v128
    %v133 = vadd.s32 %v129, 1
    %v134 = vsel %vm132, %v133, %v129
    %v135 = vadd.s32 %v130, %v134
    %v136 = vadd.s32 %v135, 536870912
    %v137 = vshrl.u32 %v136, 30
    %v138 = vshll.u32 %v137, 30
    %v139 = vsub.s32 %v135, %v138
    %vm140 = vcmp.lt.s32.totalorder %v139, 0
    %v141 = vsub.s32 0, %v139
    %v142 = vsel %vm140, %v141, %v139
    %v143 = vclz %v142
    %v144 = vsub.s32 %v143, 2
    %vm145 = vcmp.gt.s32.totalorder 0, %v144
    %v146 = vsel %vm145, 0, %v144
    %v147 = vsub.s32 32, %v146
    %v148 = vshll.u32 %v139, %v146
    %v149 = vshrl.u32 %v131, %v147
    %v150 = vor.u32 %v148, %v149
    %v151 = vsub.s32 4294967266, %v146
    %v152 = vadd.s32 %v151, 127
    %v153 = vshll.u32 %v152, 23
    %v154 = vor.u32 4788187, %v153
    %v155 = vand.u32 2147483647, %v154
    %v157 = vcvt.s32.f32 %v150
    %v158 = vmul.f32 %v157, %v155
    %v159 = vxor.u32 %v158, 2147483648
    %v160 = vsel %vm77, %v159, %v158
    %v161 = vsub.s32 4, %v137
    %v162 = vsel %vm77, %v161, %v137
    %v163 = vsel %vm76, %v67, %v160
    %v164 = vsel %vm76, 0, %v162
    %v165 = vcosq.f32.pop %v163
    %v166 = vsinq.f32.pop %v163
    %vm167 = vweird.f32 %v67
    %v168 = vadd.s32 %v164, 3
    %v169 = vand.u32 %v168, 3
    %vm170 = vcmp.lt.s32.totalorder %v169, 2
    %vm171 = vcmp.eq.s32.totalorder %v169, 0
    %v172 = vxor.u32 %v166, 2147483648
    %v173 = vsel %vm171, %v165, %v172
    %vm174 = vcmp.eq.s32.totalorder %v169, 2
    %v175 = vxor.u32 %v165, 2147483648
    %v176 = vsel %vm174, %v175, %v166
    %v177 = vsel %vm170, %v173, %v176
    %v178 = vsel %vm167, nan, %v177
    %v179 = vand.u32 2147483647, %v68
    %vm180 = vcmp.le.f32.partialorder %v179, 0.7853982
    %vm181 = vcmp.lt.s32.totalorder %v68, 0
    %v182 = vand.u32 %v68, 2139095040
    %v183 = vshrl.u32 %v182, 23
    %v184 = vsub.s32 %v183, 127
    %v185 = vand.u32 2147483647, %v68
    %v186 = vand.u32 %v185, 8388607
    %v187 = vor.u32 %v186, 8388608
    %v188 = vsub.s32 0, %v187
    %v189 = vadd.s32 %v184, 1
    %vm190 = vcmp.gt.s32.totalorder %v189, 0
    %v191 = vsel %vm190, %v189, 0
    %v192 = vshrl.u32 %v191, 5
    %v193 = vand.u32 %v191, 31
    %v194 = vsub.s32 32, %v193
    %v195 = vshrl.u32 683565275, %v194
    %v196 = vshll.u32 683565275, %v193
    %v197 = vshrl.u32 2475754826, %v194
    %v198 = vor.u32 %v196, %v197
    %v199 = vshll.u32 2475754826, %v193
    %v200 = vshrl.u32 2131351028, %v194
    %v201 = vor.u32 %v199, %v200
    %v202 = vshll.u32 2131351028, %v193
    %v203 = vshrl.u32 2102212464, %v194
    %v204 = vor.u32 %v202, %v203
    %v205 = vshll.u32 2102212464, %v193
    %v206 = vshrl.u32 920167782, %v194
    %v207 = vor.u32 %v205, %v206
    %v208 = vshll.u32 920167782, %v193
    %v209 = vshrl.u32 1326507024, %v194
    %v210 = vor.u32 %v208, %v209
    %vm211 = vcmp.lt.s32.totalorder %v192, 1
    %vm212 = vcmp.lt.s32.totalorder %v192, 2
    %vm213 = vcmp.lt.s32.totalorder %v192, 3
    %vm214 = vcmp.lt.s32.totalorder %v192, 4
    %v215 = vsel %vm211, %v195, %v198
    %v216 = vsel %vm214, %v204, 2102212464
    %v217 = vsel %vm213, %v201, %v216
    %v218 = vsel %vm212, %v215, %v217
    %v219 = vsel %vm211, %v198, %v201
    %v220 = vsel %vm214, %v207, 920167782
    %v221 = vsel %vm213, %v204, %v220
    %v222 = vsel %vm212, %v219, %v221
    %v223 = vsel %vm211, %v201, %v204
    %v224 = vsel %vm214, %v210, 1326507024
    %v225 = vsel %vm213, %v207, %v224
    %v226 = vsel %vm212, %v223, %v225
    %v227 = vshll.u32 %v187, 8
    %v228 = vmul.u32.u64.compose %v227, %v226
    %v229 = vextract.low.u32 %v228
    %v230 = vextract.high.u32 %v228
    %v231 = vmul.u32.u64.compose %v227, %v222
    %v232 = vextract.low.u32 %v231
    %v233 = vextract.high.u32 %v231
    %v234 = vmul.u32 %v227, %v218
    %v235 = vadd.s32 %v230, %v232
    %vm236 = vc.u32 %v230, %v232
    %v237 = vadd.s32 %v233, 1
    %v238 = vsel %vm236, %v237, %v233
    %v239 = vadd.s32 %v234, %v238
    %v240 = vadd.s32 %v239, 536870912
    %v241 = vshrl.u32 %v240, 30
    %v242 = vshll.u32 %v241, 30
    %v243 = vsub.s32 %v239, %v242
    %vm244 = vcmp.lt.s32.totalorder %v243, 0
    %v245 = vsub.s32 0, %v243
    %v246 = vsel %vm244, %v245, %v243
    %v247 = vclz %v246
    %v248 = vsub.s32 %v247, 2
    %vm249 = vcmp.gt.s32.totalorder 0, %v248
    %v250 = vsel %vm249, 0, %v248
    %v251 = vsub.s32 32, %v250
    %v252 = vshll.u32 %v243, %v250
    %v253 = vshrl.u32 %v235, %v251
    %v254 = vor.u32 %v252, %v253
    %v255 = vsub.s32 4294967266, %v250
    %v256 = vadd.s32 %v255, 127
    %v257 = vshll.u32 %v256, 23
    %v258 = vor.u32 4788187, %v257
    %v259 = vand.u32 2147483647, %v258
    %v261 = vcvt.s32.f32 %v254
    %v262 = vmul.f32 %v261, %v259
    %v263 = vxor.u32 %v262, 2147483648
    %v264 = vsel %vm181, %v263, %v262
    %v265 = vsub.s32 4, %v241
    %v266 = vsel %vm181, %v265, %v241
    %v267 = vsel %vm180, %v68, %v264
    %v268 = vsel %vm180, 0, %v266
    %v269 = vcosq.f32.pop %v267
    %v270 = vsinq.f32.pop %v267
    %vm271 = vweird.f32 %v68
    %v272 = vadd.s32 %v268, 3
    %v273 = vand.u32 %v272, 3
    %vm274 = vcmp.lt.s32.totalorder %v273, 2
    %vm275 = vcmp.eq.s32.totalorder %v273, 0
    %v276 = vxor.u32 %v270, 2147483648
    %v277 = vsel %vm275, %v269, %v276
    %vm278 = vcmp.eq.s32.totalorder %v273, 2
    %v279 = vxor.u32 %v269, 2147483648
    %v280 = vsel %vm278, %v279, %v270
    %v281 = vsel %vm274, %v277, %v280
    %v282 = vsel %vm271, nan, %v281
    %v283 = vand.u32 2147483647, %v69
    %vm284 = vcmp.le.f32.partialorder %v283, 0.7853982
    %vm285 = vcmp.lt.s32.totalorder %v69, 0
    %v286 = vand.u32 %v69, 2139095040
    %v287 = vshrl.u32 %v286, 23
    %v288 = vsub.s32 %v287, 127
    %v289 = vand.u32 2147483647, %v69
    %v290 = vand.u32 %v289, 8388607
    %v291 = vor.u32 %v290, 8388608
    %v292 = vsub.s32 0, %v291
    %v293 = vadd.s32 %v288, 1
    %vm294 = vcmp.gt.s32.totalorder %v293, 0
    %v295 = vsel %vm294, %v293, 0
    %v296 = vshrl.u32 %v295, 5
    %v297 = vand.u32 %v295, 31
    %v298 = vsub.s32 32, %v297
    %v299 = vshrl.u32 683565275, %v298
    %v300 = vshll.u32 683565275, %v297
    %v301 = vshrl.u32 2475754826, %v298
    %v302 = vor.u32 %v300, %v301
    %v303 = vshll.u32 2475754826, %v297
    %v304 = vshrl.u32 2131351028, %v298
    %v305 = vor.u32 %v303, %v304
    %v306 = vshll.u32 2131351028, %v297
    %v307 = vshrl.u32 2102212464, %v298
    %v308 = vor.u32 %v306, %v307
    %v309 = vshll.u32 2102212464, %v297
    %v310 = vshrl.u32 920167782, %v298
    %v311 = vor.u32 %v309, %v310
    %v312 = vshll.u32 920167782, %v297
    %v313 = vshrl.u32 1326507024, %v298
    %v314 = vor.u32 %v312, %v313
    %vm315 = vcmp.lt.s32.totalorder %v296, 1
    %vm316 = vcmp.lt.s32.totalorder %v296, 2
    %vm317 = vcmp.lt.s32.totalorder %v296, 3
    %vm318 = vcmp.lt.s32.totalorder %v296, 4
    %v319 = vsel %vm315, %v299, %v302
    %v320 = vsel %vm318, %v308, 2102212464
    %v321 = vsel %vm317, %v305, %v320
    %v322 = vsel %vm316, %v319, %v321
    %v323 = vsel %vm315, %v302, %v305
    %v324 = vsel %vm318, %v311, 920167782
    %v325 = vsel %vm317, %v308, %v324
    %v326 = vsel %vm316, %v323, %v325
    %v327 = vsel %vm315, %v305, %v308
    %v328 = vsel %vm318, %v314, 1326507024
    %v329 = vsel %vm317, %v311, %v328
    %v330 = vsel %vm316, %v327, %v329
    %v331 = vshll.u32 %v291, 8
    %v332 = vmul.u32.u64.compose %v331, %v330
    %v333 = vextract.low.u32 %v332
    %v334 = vextract.high.u32 %v332
    %v335 = vmul.u32.u64.compose %v331, %v326
    %v336 = vextract.low.u32 %v335
    %v337 = vextract.high.u32 %v335
    %v338 = vmul.u32 %v331, %v322
    %v339 = vadd.s32 %v334, %v336
    %vm340 = vc.u32 %v334, %v336
    %v341 = vadd.s32 %v337, 1
    %v342 = vsel %vm340, %v341, %v337
    %v343 = vadd.s32 %v338, %v342
    %v344 = vadd.s32 %v343, 536870912
    %v345 = vshrl.u32 %v344, 30
    %v346 = vshll.u32 %v345, 30
    %v347 = vsub.s32 %v343, %v346
    %vm348 = vcmp.lt.s32.totalorder %v347, 0
    %v349 = vsub.s32 0, %v347
    %v350 = vsel %vm348, %v349, %v347
    %v351 = vclz %v350
    %v352 = vsub.s32 %v351, 2
    %vm353 = vcmp.gt.s32.totalorder 0, %v352
    %v354 = vsel %vm353, 0, %v352
    %v355 = vsub.s32 32, %v354
    %v356 = vshll.u32 %v347, %v354
    %v357 = vshrl.u32 %v339, %v355
    %v358 = vor.u32 %v356, %v357
    %v359 = vsub.s32 4294967266, %v354
    %v360 = vadd.s32 %v359, 127
    %v361 = vshll.u32 %v360, 23
    %v362 = vor.u32 4788187, %v361
    %v363 = vand.u32 2147483647, %v362
    %v365 = vcvt.s32.f32 %v358
    %v366 = vmul.f32 %v365, %v363
    %v367 = vxor.u32 %v366, 2147483648
    %v368 = vsel %vm285, %v367, %v366
    %v369 = vsub.s32 4, %v345
    %v370 = vsel %vm285, %v369, %v345
    %v371 = vsel %vm284, %v69, %v368
    %v372 = vsel %vm284, 0, %v370
    %v373 = vcosq.f32.pop %v371
    %v374 = vsinq.f32.pop %v371
    %vm375 = vweird.f32 %v69
    %v376 = vadd.s32 %v372, 3
    %v377 = vand.u32 %v376, 3
    %vm378 = vcmp.lt.s32.totalorder %v377, 2
    %vm379 = vcmp.eq.s32.totalorder %v377, 0
    %v380 = vxor.u32 %v374, 2147483648
    %v381 = vsel %vm379, %v373, %v380
    %vm382 = vcmp.eq.s32.totalorder %v377, 2
    %v383 = vxor.u32 %v373, 2147483648
    %v384 = vsel %vm382, %v383, %v374
    %v385 = vsel %vm378, %v381, %v384
    %v386 = vsel %vm375, nan, %v385
    %v387 = vand.u32 2147483647, %v70
    %vm388 = vcmp.le.f32.partialorder %v387, 0.7853982
    %vm389 = vcmp.lt.s32.totalorder %v70, 0
    %v390 = vand.u32 %v70, 2139095040
    %v391 = vshrl.u32 %v390, 23
    %v392 = vsub.s32 %v391, 127
    %v393 = vand.u32 2147483647, %v70
    %v394 = vand.u32 %v393, 8388607
    %v395 = vor.u32 %v394, 8388608
    %v396 = vsub.s32 0, %v395
    %v397 = vadd.s32 %v392, 1
    %vm398 = vcmp.gt.s32.totalorder %v397, 0
    %v399 = vsel %vm398, %v397, 0
    %v400 = vshrl.u32 %v399, 5
    %v401 = vand.u32 %v399, 31
    %v402 = vsub.s32 32, %v401
    %v403 = vshrl.u32 683565275, %v402
    %v404 = vshll.u32 683565275, %v401
    %v405 = vshrl.u32 2475754826, %v402
    %v406 = vor.u32 %v404, %v405
    %v407 = vshll.u32 2475754826, %v401
    %v408 = vshrl.u32 2131351028, %v402
    %v409 = vor.u32 %v407, %v408
    %v410 = vshll.u32 2131351028, %v401
    %v411 = vshrl.u32 2102212464, %v402
    %v412 = vor.u32 %v410, %v411
    %v413 = vshll.u32 2102212464, %v401
    %v414 = vshrl.u32 920167782, %v402
    %v415 = vor.u32 %v413, %v414
    %v416 = vshll.u32 920167782, %v401
    %v417 = vshrl.u32 1326507024, %v402
    %v418 = vor.u32 %v416, %v417
    %vm419 = vcmp.lt.s32.totalorder %v400, 1
    %vm420 = vcmp.lt.s32.totalorder %v400, 2
    %vm421 = vcmp.lt.s32.totalorder %v400, 3
    %vm422 = vcmp.lt.s32.totalorder %v400, 4
    %v423 = vsel %vm419, %v403, %v406
    %v424 = vsel %vm422, %v412, 2102212464
    %v425 = vsel %vm421, %v409, %v424
    %v426 = vsel %vm420, %v423, %v425
    %v427 = vsel %vm419, %v406, %v409
    %v428 = vsel %vm422, %v415, 920167782
    %v429 = vsel %vm421, %v412, %v428
    %v430 = vsel %vm420, %v427, %v429
    %v431 = vsel %vm419, %v409, %v412
    %v432 = vsel %vm422, %v418, 1326507024
    %v433 = vsel %vm421, %v415, %v432
    %v434 = vsel %vm420, %v431, %v433
    %v435 = vshll.u32 %v395, 8
    %v436 = vmul.u32.u64.compose %v435, %v434
    %v437 = vextract.low.u32 %v436
    %v438 = vextract.high.u32 %v436
    %v439 = vmul.u32.u64.compose %v435, %v430
    %v440 = vextract.low.u32 %v439
    %v441 = vextract.high.u32 %v439
    %v442 = vmul.u32 %v435, %v426
    %v443 = vadd.s32 %v438, %v440
    %vm444 = vc.u32 %v438, %v440
    %v445 = vadd.s32 %v441, 1
    %v446 = vsel %vm444, %v445, %v441
    %v447 = vadd.s32 %v442, %v446
    %v448 = vadd.s32 %v447, 536870912
    %v449 = vshrl.u32 %v448, 30
    %v450 = vshll.u32 %v449, 30
    %v451 = vsub.s32 %v447, %v450
    %vm452 = vcmp.lt.s32.totalorder %v451, 0
    %v453 = vsub.s32 0, %v451
    %v454 = vsel %vm452, %v453, %v451
    %v455 = vclz %v454
    %v456 = vsub.s32 %v455, 2
    %vm457 = vcmp.gt.s32.totalorder 0, %v456
    %v458 = vsel %vm457, 0, %v456
    %v459 = vsub.s32 32, %v458
    %v460 = vshll.u32 %v451, %v458
    %v461 = vshrl.u32 %v443, %v459
    %v462 = vor.u32 %v460, %v461
    %v463 = vsub.s32 4294967266, %v458
    %v464 = vadd.s32 %v463, 127
    %v465 = vshll.u32 %v464, 23
    %v466 = vor.u32 4788187, %v465
    %v467 = vand.u32 2147483647, %v466
    %v469 = vcvt.s32.f32 %v462
    %v470 = vmul.f32 %v469, %v467
    %v471 = vxor.u32 %v470, 2147483648
    %v472 = vsel %vm389, %v471, %v470
    %v473 = vsub.s32 4, %v449
    %v474 = vsel %vm389, %v473, %v449
    %v475 = vsel %vm388, %v70, %v472
    %v476 = vsel %vm388, 0, %v474
    %v477 = vcosq.f32.pop %v475
    %v478 = vsinq.f32.pop %v475
    %vm479 = vweird.f32 %v70
    %v480 = vadd.s32 %v476, 3
    %v481 = vand.u32 %v480, 3
    %vm482 = vcmp.lt.s32.totalorder %v481, 2
    %vm483 = vcmp.eq.s32.totalorder %v481, 0
    %v484 = vxor.u32 %v478, 2147483648
    %v485 = vsel %vm483, %v477, %v484
    %vm486 = vcmp.eq.s32.totalorder %v481, 2
    %v487 = vxor.u32 %v477, 2147483648
    %v488 = vsel %vm486, %v487, %v478
    %v489 = vsel %vm482, %v485, %v488
    %v490 = vsel %vm479, nan, %v489
    %v491 = vand.u32 2147483647, %v71
    %vm492 = vcmp.le.f32.partialorder %v491, 0.7853982
    %vm493 = vcmp.lt.s32.totalorder %v71, 0
    %v494 = vand.u32 %v71, 2139095040
    %v495 = vshrl.u32 %v494, 23
    %v496 = vsub.s32 %v495, 127
    %v497 = vand.u32 2147483647, %v71
    %v498 = vand.u32 %v497, 8388607
    %v499 = vor.u32 %v498, 8388608
    %v500 = vsub.s32 0, %v499
    %v501 = vadd.s32 %v496, 1
    %vm502 = vcmp.gt.s32.totalorder %v501, 0
    %v503 = vsel %vm502, %v501, 0
    %v504 = vshrl.u32 %v503, 5
    %v505 = vand.u32 %v503, 31
    %v506 = vsub.s32 32, %v505
    %v507 = vshrl.u32 683565275, %v506
    %v508 = vshll.u32 683565275, %v505
    %v509 = vshrl.u32 2475754826, %v506
    %v510 = vor.u32 %v508, %v509
    %v511 = vshll.u32 2475754826, %v505
    %v512 = vshrl.u32 2131351028, %v506
    %v513 = vor.u32 %v511, %v512
    %v514 = vshll.u32 2131351028, %v505
    %v515 = vshrl.u32 2102212464, %v506
    %v516 = vor.u32 %v514, %v515
    %v517 = vshll.u32 2102212464, %v505
    %v518 = vshrl.u32 920167782, %v506
    %v519 = vor.u32 %v517, %v518
    %v520 = vshll.u32 920167782, %v505
    %v521 = vshrl.u32 1326507024, %v506
    %v522 = vor.u32 %v520, %v521
    %vm523 = vcmp.lt.s32.totalorder %v504, 1
    %vm524 = vcmp.lt.s32.totalorder %v504, 2
    %vm525 = vcmp.lt.s32.totalorder %v504, 3
    %vm526 = vcmp.lt.s32.totalorder %v504, 4
    %v527 = vsel %vm523, %v507, %v510
    %v528 = vsel %vm526, %v516, 2102212464
    %v529 = vsel %vm525, %v513, %v528
    %v530 = vsel %vm524, %v527, %v529
    %v531 = vsel %vm523, %v510, %v513
    %v532 = vsel %vm526, %v519, 920167782
    %v533 = vsel %vm525, %v516, %v532
    %v534 = vsel %vm524, %v531, %v533
    %v535 = vsel %vm523, %v513, %v516
    %v536 = vsel %vm526, %v522, 1326507024
    %v537 = vsel %vm525, %v519, %v536
    %v538 = vsel %vm524, %v535, %v537
    %v539 = vshll.u32 %v499, 8
    %v540 = vmul.u32.u64.compose %v539, %v538
    %v541 = vextract.low.u32 %v540
    %v542 = vextract.high.u32 %v540
    %v543 = vmul.u32.u64.compose %v539, %v534
    %v544 = vextract.low.u32 %v543
    %v545 = vextract.high.u32 %v543
    %v546 = vmul.u32 %v539, %v530
    %v547 = vadd.s32 %v542, %v544
    %vm548 = vc.u32 %v542, %v544
    %v549 = vadd.s32 %v545, 1
    %v550 = vsel %vm548, %v549, %v545
    %v551 = vadd.s32 %v546, %v550
    %v552 = vadd.s32 %v551, 536870912
    %v553 = vshrl.u32 %v552, 30
    %v554 = vshll.u32 %v553, 30
    %v555 = vsub.s32 %v551, %v554
    %vm556 = vcmp.lt.s32.totalorder %v555, 0
    %v557 = vsub.s32 0, %v555
    %v558 = vsel %vm556, %v557, %v555
    %v559 = vclz %v558
    %v560 = vsub.s32 %v559, 2
    %vm561 = vcmp.gt.s32.totalorder 0, %v560
    %v562 = vsel %vm561, 0, %v560
    %v563 = vsub.s32 32, %v562
    %v564 = vshll.u32 %v555, %v562
    %v565 = vshrl.u32 %v547, %v563
    %v566 = vor.u32 %v564, %v565
    %v567 = vsub.s32 4294967266, %v562
    %v568 = vadd.s32 %v567, 127
    %v569 = vshll.u32 %v568, 23
    %v570 = vor.u32 4788187, %v569
    %v571 = vand.u32 2147483647, %v570
    %v573 = vcvt.s32.f32 %v566
    %v574 = vmul.f32 %v573, %v571
    %v575 = vxor.u32 %v574, 2147483648
    %v576 = vsel %vm493, %v575, %v574
    %v577 = vsub.s32 4, %v553
    %v578 = vsel %vm493, %v577, %v553
    %v579 = vsel %vm492, %v71, %v576
    %v580 = vsel %vm492, 0, %v578
    %v581 = vcosq.f32.pop %v579
    %v582 = vsinq.f32.pop %v579
    %vm583 = vweird.f32 %v71
    %v584 = vadd.s32 %v580, 3
    %v585 = vand.u32 %v584, 3
    %vm586 = vcmp.lt.s32.totalorder %v585, 2
    %vm587 = vcmp.eq.s32.totalorder %v585, 0
    %v588 = vxor.u32 %v582, 2147483648
    %v589 = vsel %vm587, %v581, %v588
    %vm590 = vcmp.eq.s32.totalorder %v585, 2
    %v591 = vxor.u32 %v581, 2147483648
    %v592 = vsel %vm590, %v591, %v582
    %v593 = vsel %vm586, %v589, %v592
    %v594 = vsel %vm583, nan, %v593
    %v595 = vand.u32 2147483647, %v72
    %vm596 = vcmp.le.f32.partialorder %v595, 0.7853982
    %vm597 = vcmp.lt.s32.totalorder %v72, 0
    %v598 = vand.u32 %v72, 2139095040
    %v599 = vshrl.u32 %v598, 23
    %v600 = vsub.s32 %v599, 127
    %v601 = vand.u32 2147483647, %v72
    %v602 = vand.u32 %v601, 8388607
    %v603 = vor.u32 %v602, 8388608
    %v604 = vsub.s32 0, %v603
    %v605 = vadd.s32 %v600, 1
    %vm606 = vcmp.gt.s32.totalorder %v605, 0
    %v607 = vsel %vm606, %v605, 0
    %v608 = vshrl.u32 %v607, 5
    %v609 = vand.u32 %v607, 31
    %v610 = vsub.s32 32, %v609
    %v611 = vshrl.u32 683565275, %v610
    %v612 = vshll.u32 683565275, %v609
    %v613 = vshrl.u32 2475754826, %v610
    %v614 = vor.u32 %v612, %v613
    %v615 = vshll.u32 2475754826, %v609
    %v616 = vshrl.u32 2131351028, %v610
    %v617 = vor.u32 %v615, %v616
    %v618 = vshll.u32 2131351028, %v609
    %v619 = vshrl.u32 2102212464, %v610
    %v620 = vor.u32 %v618, %v619
    %v621 = vshll.u32 2102212464, %v609
    %v622 = vshrl.u32 920167782, %v610
    %v623 = vor.u32 %v621, %v622
    %v624 = vshll.u32 920167782, %v609
    %v625 = vshrl.u32 1326507024, %v610
    %v626 = vor.u32 %v624, %v625
    %vm627 = vcmp.lt.s32.totalorder %v608, 1
    %vm628 = vcmp.lt.s32.totalorder %v608, 2
    %vm629 = vcmp.lt.s32.totalorder %v608, 3
    %vm630 = vcmp.lt.s32.totalorder %v608, 4
    %v631 = vsel %vm627, %v611, %v614
    %v632 = vsel %vm630, %v620, 2102212464
    %v633 = vsel %vm629, %v617, %v632
    %v634 = vsel %vm628, %v631, %v633
    %v635 = vsel %vm627, %v614, %v617
    %v636 = vsel %vm630, %v623, 920167782
    %v637 = vsel %vm629, %v620, %v636
    %v638 = vsel %vm628, %v635, %v637
    %v639 = vsel %vm627, %v617, %v620
    %v640 = vsel %vm630, %v626, 1326507024
    %v641 = vsel %vm629, %v623, %v640
    %v642 = vsel %vm628, %v639, %v641
    %v643 = vshll.u32 %v603, 8
    %v644 = vmul.u32.u64.compose %v643, %v642
    %v645 = vextract.low.u32 %v644
    %v646 = vextract.high.u32 %v644
    %v647 = vmul.u32.u64.compose %v643, %v638
    %v648 = vextract.low.u32 %v647
    %v649 = vextract.high.u32 %v647
    %v650 = vmul.u32 %v643, %v634
    %v651 = vadd.s32 %v646, %v648
    %vm652 = vc.u32 %v646, %v648
    %v653 = vadd.s32 %v649, 1
    %v654 = vsel %vm652, %v653, %v649
    %v655 = vadd.s32 %v650, %v654
    %v656 = vadd.s32 %v655, 536870912
    %v657 = vshrl.u32 %v656, 30
    %v658 = vshll.u32 %v657, 30
    %v659 = vsub.s32 %v655, %v658
    %vm660 = vcmp.lt.s32.totalorder %v659, 0
    %v661 = vsub.s32 0, %v659
    %v662 = vsel %vm660, %v661, %v659
    %v663 = vclz %v662
    %v664 = vsub.s32 %v663, 2
    %vm665 = vcmp.gt.s32.totalorder 0, %v664
    %v666 = vsel %vm665, 0, %v664
    %v667 = vsub.s32 32, %v666
    %v668 = vshll.u32 %v659, %v666
    %v669 = vshrl.u32 %v651, %v667
    %v670 = vor.u32 %v668, %v669
    %v671 = vsub.s32 4294967266, %v666
    %v672 = vadd.s32 %v671, 127
    %v673 = vshll.u32 %v672, 23
    %v674 = vor.u32 4788187, %v673
    %v675 = vand.u32 2147483647, %v674
    %v677 = vcvt.s32.f32 %v670
    %v678 = vmul.f32 %v677, %v675
    %v679 = vxor.u32 %v678, 2147483648
    %v680 = vsel %vm597, %v679, %v678
    %v681 = vsub.s32 4, %v657
    %v682 = vsel %vm597, %v681, %v657
    %v683 = vsel %vm596, %v72, %v680
    %v684 = vsel %vm596, 0, %v682
    %v685 = vcosq.f32.pop %v683
    %v686 = vsinq.f32.pop %v683
    %vm687 = vweird.f32 %v72
    %v688 = vadd.s32 %v684, 3
    %v689 = vand.u32 %v688, 3
    %vm690 = vcmp.lt.s32.totalorder %v689, 2
    %vm691 = vcmp.eq.s32.totalorder %v689, 0
    %v692 = vxor.u32 %v686, 2147483648
    %v693 = vsel %vm691, %v685, %v692
    %vm694 = vcmp.eq.s32.totalorder %v689, 2
    %v695 = vxor.u32 %v685, 2147483648
    %v696 = vsel %vm694, %v695, %v686
    %v697 = vsel %vm690, %v693, %v696
    %v698 = vsel %vm687, nan, %v697
    %v699 = vand.u32 2147483647, %v73
    %vm700 = vcmp.le.f32.partialorder %v699, 0.7853982
    %vm701 = vcmp.lt.s32.totalorder %v73, 0
    %v702 = vand.u32 %v73, 2139095040
    %v703 = vshrl.u32 %v702, 23
    %v704 = vsub.s32 %v703, 127
    %v705 = vand.u32 2147483647, %v73
    %v706 = vand.u32 %v705, 8388607
    %v707 = vor.u32 %v706, 8388608
    %v708 = vsub.s32 0, %v707
    %v709 = vadd.s32 %v704, 1
    %vm710 = vcmp.gt.s32.totalorder %v709, 0
    %v711 = vsel %vm710, %v709, 0
    %v712 = vshrl.u32 %v711, 5
    %v713 = vand.u32 %v711, 31
    %v714 = vsub.s32 32, %v713
    %v715 = vshrl.u32 683565275, %v714
    %v716 = vshll.u32 683565275, %v713
    %v717 = vshrl.u32 2475754826, %v714
    %v718 = vor.u32 %v716, %v717
    %v719 = vshll.u32 2475754826, %v713
    %v720 = vshrl.u32 2131351028, %v714
    %v721 = vor.u32 %v719, %v720
    %v722 = vshll.u32 2131351028, %v713
    %v723 = vshrl.u32 2102212464, %v714
    %v724 = vor.u32 %v722, %v723
    %v725 = vshll.u32 2102212464, %v713
    %v726 = vshrl.u32 920167782, %v714
    %v727 = vor.u32 %v725, %v726
    %v728 = vshll.u32 920167782, %v713
    %v729 = vshrl.u32 1326507024, %v714
    %v730 = vor.u32 %v728, %v729
    %vm731 = vcmp.lt.s32.totalorder %v712, 1
    %vm732 = vcmp.lt.s32.totalorder %v712, 2
    %vm733 = vcmp.lt.s32.totalorder %v712, 3
    %vm734 = vcmp.lt.s32.totalorder %v712, 4
    %v735 = vsel %vm731, %v715, %v718
    %v736 = vsel %vm734, %v724, 2102212464
    %v737 = vsel %vm733, %v721, %v736
    %v738 = vsel %vm732, %v735, %v737
    %v739 = vsel %vm731, %v718, %v721
    %v740 = vsel %vm734, %v727, 920167782
    %v741 = vsel %vm733, %v724, %v740
    %v742 = vsel %vm732, %v739, %v741
    %v743 = vsel %vm731, %v721, %v724
    %v744 = vsel %vm734, %v730, 1326507024
    %v745 = vsel %vm733, %v727, %v744
    %v746 = vsel %vm732, %v743, %v745
    %v747 = vshll.u32 %v707, 8
    %v748 = vmul.u32.u64.compose %v747, %v746
    %v749 = vextract.low.u32 %v748
    %v750 = vextract.high.u32 %v748
    %v751 = vmul.u32.u64.compose %v747, %v742
    %v752 = vextract.low.u32 %v751
    %v753 = vextract.high.u32 %v751
    %v754 = vmul.u32 %v747, %v738
    %v755 = vadd.s32 %v750, %v752
    %vm756 = vc.u32 %v750, %v752
    %v757 = vadd.s32 %v753, 1
    %v758 = vsel %vm756, %v757, %v753
    %v759 = vadd.s32 %v754, %v758
    %v760 = vadd.s32 %v759, 536870912
    %v761 = vshrl.u32 %v760, 30
    %v762 = vshll.u32 %v761, 30
    %v763 = vsub.s32 %v759, %v762
    %vm764 = vcmp.lt.s32.totalorder %v763, 0
    %v765 = vsub.s32 0, %v763
    %v766 = vsel %vm764, %v765, %v763
    %v767 = vclz %v766
    %v768 = vsub.s32 %v767, 2
    %vm769 = vcmp.gt.s32.totalorder 0, %v768
    %v770 = vsel %vm769, 0, %v768
    %v771 = vsub.s32 32, %v770
    %v772 = vshll.u32 %v763, %v770
    %v773 = vshrl.u32 %v755, %v771
    %v774 = vor.u32 %v772, %v773
    %v775 = vsub.s32 4294967266, %v770
    %v776 = vadd.s32 %v775, 127
    %v777 = vshll.u32 %v776, 23
    %v778 = vor.u32 4788187, %v777
    %v779 = vand.u32 2147483647, %v778
    %v781 = vcvt.s32.f32 %v774
    %v782 = vmul.f32 %v781, %v779
    %v783 = vxor.u32 %v782, 2147483648
    %v784 = vsel %vm701, %v783, %v782
    %v785 = vsub.s32 4, %v761
    %v786 = vsel %vm701, %v785, %v761
    %v787 = vsel %vm700, %v73, %v784
    %v788 = vsel %vm700, 0, %v786
    %v789 = vcosq.f32.pop %v787
    %v790 = vsinq.f32.pop %v787
    %vm791 = vweird.f32 %v73
    %v792 = vadd.s32 %v788, 3
    %v793 = vand.u32 %v792, 3
    %vm794 = vcmp.lt.s32.totalorder %v793, 2
    %vm795 = vcmp.eq.s32.totalorder %v793, 0
    %v796 = vxor.u32 %v790, 2147483648
    %v797 = vsel %vm795, %v789, %v796
    %vm798 = vcmp.eq.s32.totalorder %v793, 2
    %v799 = vxor.u32 %v789, 2147483648
    %v800 = vsel %vm798, %v799, %v790
    %v801 = vsel %vm794, %v797, %v800
    %v802 = vsel %vm791, nan, %v801
    %v803 = vand.u32 2147483647, %v74
    %vm804 = vcmp.le.f32.partialorder %v803, 0.7853982
    %vm805 = vcmp.lt.s32.totalorder %v74, 0
    %v806 = vand.u32 %v74, 2139095040
    %v807 = vshrl.u32 %v806, 23
    %v808 = vsub.s32 %v807, 127
    %v809 = vand.u32 2147483647, %v74
    %v810 = vand.u32 %v809, 8388607
    %v811 = vor.u32 %v810, 8388608
    %v812 = vsub.s32 0, %v811
    %v813 = vadd.s32 %v808, 1
    %vm814 = vcmp.gt.s32.totalorder %v813, 0
    %v815 = vsel %vm814, %v813, 0
    %v816 = vshrl.u32 %v815, 5
    %v817 = vand.u32 %v815, 31
    %v818 = vsub.s32 32, %v817
    %v819 = vshrl.u32 683565275, %v818
    %v820 = vshll.u32 683565275, %v817
    %v821 = vshrl.u32 2475754826, %v818
    %v822 = vor.u32 %v820, %v821
    %v823 = vshll.u32 2475754826, %v817
    %v824 = vshrl.u32 2131351028, %v818
    %v825 = vor.u32 %v823, %v824
    %v826 = vshll.u32 2131351028, %v817
    %v827 = vshrl.u32 2102212464, %v818
    %v828 = vor.u32 %v826, %v827
    %v829 = vshll.u32 2102212464, %v817
    %v830 = vshrl.u32 920167782, %v818
    %v831 = vor.u32 %v829, %v830
    %v832 = vshll.u32 920167782, %v817
    %v833 = vshrl.u32 1326507024, %v818
    %v834 = vor.u32 %v832, %v833
    %vm835 = vcmp.lt.s32.totalorder %v816, 1
    %vm836 = vcmp.lt.s32.totalorder %v816, 2
    %vm837 = vcmp.lt.s32.totalorder %v816, 3
    %vm838 = vcmp.lt.s32.totalorder %v816, 4
    %v839 = vsel %vm835, %v819, %v822
    %v840 = vsel %vm838, %v828, 2102212464
    %v841 = vsel %vm837, %v825, %v840
    %v842 = vsel %vm836, %v839, %v841
    %v843 = vsel %vm835, %v822, %v825
    %v844 = vsel %vm838, %v831, 920167782
    %v845 = vsel %vm837, %v828, %v844
    %v846 = vsel %vm836, %v843, %v845
    %v847 = vsel %vm835, %v825, %v828
    %v848 = vsel %vm838, %v834, 1326507024
    %v849 = vsel %vm837, %v831, %v848
    %v850 = vsel %vm836, %v847, %v849
    %v851 = vshll.u32 %v811, 8
    %v852 = vmul.u32.u64.compose %v851, %v850
    %v853 = vextract.low.u32 %v852
    %v854 = vextract.high.u32 %v852
    %v855 = vmul.u32.u64.compose %v851, %v846
    %v856 = vextract.low.u32 %v855
    %v857 = vextract.high.u32 %v855
    %v858 = vmul.u32 %v851, %v842
    %v859 = vadd.s32 %v854, %v856
    %vm860 = vc.u32 %v854, %v856
    %v861 = vadd.s32 %v857, 1
    %v862 = vsel %vm860, %v861, %v857
    %v863 = vadd.s32 %v858, %v862
    %v864 = vadd.s32 %v863, 536870912
    %v865 = vshrl.u32 %v864, 30
    %v866 = vshll.u32 %v865, 30
    %v867 = vsub.s32 %v863, %v866
    %vm868 = vcmp.lt.s32.totalorder %v867, 0
    %v869 = vsub.s32 0, %v867
    %v870 = vsel %vm868, %v869, %v867
    %v871 = vclz %v870
    %v872 = vsub.s32 %v871, 2
    %vm873 = vcmp.gt.s32.totalorder 0, %v872
    %v874 = vsel %vm873, 0, %v872
    %v875 = vsub.s32 32, %v874
    %v876 = vshll.u32 %v867, %v874
    %v877 = vshrl.u32 %v859, %v875
    %v878 = vor.u32 %v876, %v877
    %v879 = vsub.s32 4294967266, %v874
    %v880 = vadd.s32 %v879, 127
    %v881 = vshll.u32 %v880, 23
    %v882 = vor.u32 4788187, %v881
    %v883 = vand.u32 2147483647, %v882
    %v885 = vcvt.s32.f32 %v878
    %v886 = vmul.f32 %v885, %v883
    %v887 = vxor.u32 %v886, 2147483648
    %v888 = vsel %vm805, %v887, %v886
    %v889 = vsub.s32 4, %v865
    %v890 = vsel %vm805, %v889, %v865
    %v891 = vsel %vm804, %v74, %v888
    %v892 = vsel %vm804, 0, %v890
    %v893 = vcosq.f32.pop %v891
    %v894 = vsinq.f32.pop %v891
    %vm895 = vweird.f32 %v74
    %v896 = vadd.s32 %v892, 3
    %v897 = vand.u32 %v896, 3
    %vm898 = vcmp.lt.s32.totalorder %v897, 2
    %vm899 = vcmp.eq.s32.totalorder %v897, 0
    %v900 = vxor.u32 %v894, 2147483648
    %v901 = vsel %vm899, %v893, %v900
    %vm902 = vcmp.eq.s32.totalorder %v897, 2
    %v903 = vxor.u32 %v893, 2147483648
    %v904 = vsel %vm902, %v903, %v894
    %v905 = vsel %vm898, %v901, %v904
    %v906 = vsel %vm895, nan, %v905
    %907 = vst [vmem:[#allocation2] sm:$0xff] %v178
    %908 = vst [vmem:[#allocation2 + $0x10] sm:$0xff] %v282
    %909 = vst [vmem:[#allocation2 + $0x20] sm:$0xff] %v386
    %910 = vst [vmem:[#allocation2 + $0x30] sm:$0xff] %v490
    %911 = vst [vmem:[#allocation2 + $0x40] sm:$0xff] %v594
    %912 = vst [vmem:[#allocation2 + $0x50] sm:$0xff] %v698
    %913 = vst [vmem:[#allocation2 + $0x60] sm:$0xff] %v802
    %914 = vst [vmem:[#allocation2 + $0x70] sm:$0xff] %v906
    %v915 = vand.u32 2147483647, %v67
    %vm916 = vcmp.le.f32.partialorder %v915, 0.7853982
    %vm917 = vcmp.lt.s32.totalorder %v67, 0
    %v918 = vand.u32 %v67, 2139095040
    %v919 = vshrl.u32 %v918, 23
    %v920 = vsub.s32 %v919, 127
    %v921 = vand.u32 2147483647, %v67
    %v922 = vand.u32 %v921, 8388607
    %v923 = vor.u32 %v922, 8388608
    %v924 = vsub.s32 0, %v923
    %v925 = vadd.s32 %v920, 1
    %vm926 = vcmp.gt.s32.totalorder %v925, 0
    %v927 = vsel %vm926, %v925, 0
    %v928 = vshrl.u32 %v927, 5
    %v929 = vand.u32 %v927, 31
    %v930 = vsub.s32 32, %v929
    %v931 = vshrl.u32 683565275, %v930
    %v932 = vshll.u32 683565275, %v929
    %v933 = vshrl.u32 2475754826, %v930
    %v934 = vor.u32 %v932, %v933
    %v935 = vshll.u32 2475754826, %v929
    %v936 = vshrl.u32 2131351028, %v930
    %v937 = vor.u32 %v935, %v936
    %v938 = vshll.u32 2131351028, %v929
    %v939 = vshrl.u32 2102212464, %v930
    %v940 = vor.u32 %v938, %v939
    %v941 = vshll.u32 2102212464, %v929
    %v942 = vshrl.u32 920167782, %v930
    %v943 = vor.u32 %v941, %v942
    %v944 = vshll.u32 920167782, %v929
    %v945 = vshrl.u32 1326507024, %v930
    %v946 = vor.u32 %v944, %v945
    %vm947 = vcmp.lt.s32.totalorder %v928, 1
    %vm948 = vcmp.lt.s32.totalorder %v928, 2
    %vm949 = vcmp.lt.s32.totalorder %v928, 3
    %vm950 = vcmp.lt.s32.totalorder %v928, 4
    %v951 = vsel %vm947, %v931, %v934
    %v952 = vsel %vm950, %v940, 2102212464
    %v953 = vsel %vm949, %v937, %v952
    %v954 = vsel %vm948, %v951, %v953
    %v955 = vsel %vm947, %v934, %v937
    %v956 = vsel %vm950, %v943, 920167782
    %v957 = vsel %vm949, %v940, %v956
    %v958 = vsel %vm948, %v955, %v957
    %v959 = vsel %vm947, %v937, %v940
    %v960 = vsel %vm950, %v946, 1326507024
    %v961 = vsel %vm949, %v943, %v960
    %v962 = vsel %vm948, %v959, %v961
    %v963 = vshll.u32 %v923, 8
    %v964 = vmul.u32.u64.compose %v963, %v962
    %v965 = vextract.low.u32 %v964
    %v966 = vextract.high.u32 %v964
    %v967 = vmul.u32.u64.compose %v963, %v958
    %v968 = vextract.low.u32 %v967
    %v969 = vextract.high.u32 %v967
    %v970 = vmul.u32 %v963, %v954
    %v971 = vadd.s32 %v966, %v968
    %vm972 = vc.u32 %v966, %v968
    %v973 = vadd.s32 %v969, 1
    %v974 = vsel %vm972, %v973, %v969
    %v975 = vadd.s32 %v970, %v974
    %v976 = vadd.s32 %v975, 536870912
    %v977 = vshrl.u32 %v976, 30
    %v978 = vshll.u32 %v977, 30
    %v979 = vsub.s32 %v975, %v978
    %vm980 = vcmp.lt.s32.totalorder %v979, 0
    %v981 = vsub.s32 0, %v979
    %v982 = vsel %vm980, %v981, %v979
    %v983 = vclz %v982
    %v984 = vsub.s32 %v983, 2
    %vm985 = vcmp.gt.s32.totalorder 0, %v984
    %v986 = vsel %vm985, 0, %v984
    %v987 = vsub.s32 32, %v986
    %v988 = vshll.u32 %v979, %v986
    %v989 = vshrl.u32 %v971, %v987
    %v990 = vor.u32 %v988, %v989
    %v991 = vsub.s32 4294967266, %v986
    %v992 = vadd.s32 %v991, 127
    %v993 = vshll.u32 %v992, 23
    %v994 = vor.u32 4788187, %v993
    %v995 = vand.u32 2147483647, %v994
    %v997 = vcvt.s32.f32 %v990
    %v998 = vmul.f32 %v997, %v995
    %v999 = vxor.u32 %v998, 2147483648
    %v1000 = vsel %vm917, %v999, %v998
    %v1001 = vsub.s32 4, %v977
    %v1002 = vsel %vm917, %v1001, %v977
    %v1003 = vsel %vm916, %v67, %v1000
    %v1004 = vsel %vm916, 0, %v1002
    %v1005 = vcosq.f32.pop %v1003
    %v1006 = vsinq.f32.pop %v1003
    %vm1007 = vweird.f32 %v67
    %v1008 = vand.u32 %v1004, 3
    %vm1009 = vcmp.lt.s32.totalorder %v1008, 2
    %vm1010 = vcmp.eq.s32.totalorder %v1008, 0
    %v1011 = vxor.u32 %v1006, 2147483648
    %v1012 = vsel %vm1010, %v1005, %v1011
    %vm1013 = vcmp.eq.s32.totalorder %v1008, 2
    %v1014 = vxor.u32 %v1005, 2147483648
    %v1015 = vsel %vm1013, %v1014, %v1006
    %v1016 = vsel %vm1009, %v1012, %v1015
    %v1017 = vsel %vm1007, nan, %v1016
    %v1018 = vand.u32 2147483647, %v68
    %vm1019 = vcmp.le.f32.partialorder %v1018, 0.7853982
    %vm1020 = vcmp.lt.s32.totalorder %v68, 0
    %v1021 = vand.u32 %v68, 2139095040
    %v1022 = vshrl.u32 %v1021, 23
    %v1023 = vsub.s32 %v1022, 127
    %v1024 = vand.u32 2147483647, %v68
    %v1025 = vand.u32 %v1024, 8388607
    %v1026 = vor.u32 %v1025, 8388608
    %v1027 = vsub.s32 0, %v1026
    %v1028 = vadd.s32 %v1023, 1
    %vm1029 = vcmp.gt.s32.totalorder %v1028, 0
    %v1030 = vsel %vm1029, %v1028, 0
    %v1031 = vshrl.u32 %v1030, 5
    %v1032 = vand.u32 %v1030, 31
    %v1033 = vsub.s32 32, %v1032
    %v1034 = vshrl.u32 683565275, %v1033
    %v1035 = vshll.u32 683565275, %v1032
    %v1036 = vshrl.u32 2475754826, %v1033
    %v1037 = vor.u32 %v1035, %v1036
    %v1038 = vshll.u32 2475754826, %v1032
    %v1039 = vshrl.u32 2131351028, %v1033
    %v1040 = vor.u32 %v1038, %v1039
    %v1041 = vshll.u32 2131351028, %v1032
    %v1042 = vshrl.u32 2102212464, %v1033
    %v1043 = vor.u32 %v1041, %v1042
    %v1044 = vshll.u32 2102212464, %v1032
    %v1045 = vshrl.u32 920167782, %v1033
    %v1046 = vor.u32 %v1044, %v1045
    %v1047 = vshll.u32 920167782, %v1032
    %v1048 = vshrl.u32 1326507024, %v1033
    %v1049 = vor.u32 %v1047, %v1048
    %vm1050 = vcmp.lt.s32.totalorder %v1031, 1
    %vm1051 = vcmp.lt.s32.totalorder %v1031, 2
    %vm1052 = vcmp.lt.s32.totalorder %v1031, 3
    %vm1053 = vcmp.lt.s32.totalorder %v1031, 4
    %v1054 = vsel %vm1050, %v1034, %v1037
    %v1055 = vsel %vm1053, %v1043, 2102212464
    %v1056 = vsel %vm1052, %v1040, %v1055
    %v1057 = vsel %vm1051, %v1054, %v1056
    %v1058 = vsel %vm1050, %v1037, %v1040
    %v1059 = vsel %vm1053, %v1046, 920167782
    %v1060 = vsel %vm1052, %v1043, %v1059
    %v1061 = vsel %vm1051, %v1058, %v1060
    %v1062 = vsel %vm1050, %v1040, %v1043
    %v1063 = vsel %vm1053, %v1049, 1326507024
    %v1064 = vsel %vm1052, %v1046, %v1063
    %v1065 = vsel %vm1051, %v1062, %v1064
    %v1066 = vshll.u32 %v1026, 8
    %v1067 = vmul.u32.u64.compose %v1066, %v1065
    %v1068 = vextract.low.u32 %v1067
    %v1069 = vextract.high.u32 %v1067
    %v1070 = vmul.u32.u64.compose %v1066, %v1061
    %v1071 = vextract.low.u32 %v1070
    %v1072 = vextract.high.u32 %v1070
    %v1073 = vmul.u32 %v1066, %v1057
    %v1074 = vadd.s32 %v1069, %v1071
    %vm1075 = vc.u32 %v1069, %v1071
    %v1076 = vadd.s32 %v1072, 1
    %v1077 = vsel %vm1075, %v1076, %v1072
    %v1078 = vadd.s32 %v1073, %v1077
    %v1079 = vadd.s32 %v1078, 536870912
    %v1080 = vshrl.u32 %v1079, 30
    %v1081 = vshll.u32 %v1080, 30
    %v1082 = vsub.s32 %v1078, %v1081
    %vm1083 = vcmp.lt.s32.totalorder %v1082, 0
    %v1084 = vsub.s32 0, %v1082
    %v1085 = vsel %vm1083, %v1084, %v1082
    %v1086 = vclz %v1085
    %v1087 = vsub.s32 %v1086, 2
    %vm1088 = vcmp.gt.s32.totalorder 0, %v1087
    %v1089 = vsel %vm1088, 0, %v1087
    %v1090 = vsub.s32 32, %v1089
    %v1091 = vshll.u32 %v1082, %v1089
    %v1092 = vshrl.u32 %v1074, %v1090
    %v1093 = vor.u32 %v1091, %v1092
    %v1094 = vsub.s32 4294967266, %v1089
    %v1095 = vadd.s32 %v1094, 127
    %v1096 = vshll.u32 %v1095, 23
    %v1097 = vor.u32 4788187, %v1096
    %v1098 = vand.u32 2147483647, %v1097
    %v1100 = vcvt.s32.f32 %v1093
    %v1101 = vmul.f32 %v1100, %v1098
    %v1102 = vxor.u32 %v1101, 2147483648
    %v1103 = vsel %vm1020, %v1102, %v1101
    %v1104 = vsub.s32 4, %v1080
    %v1105 = vsel %vm1020, %v1104, %v1080
    %v1106 = vsel %vm1019, %v68, %v1103
    %v1107 = vsel %vm1019, 0, %v1105
    %v1108 = vcosq.f32.pop %v1106
    %v1109 = vsinq.f32.pop %v1106
    %vm1110 = vweird.f32 %v68
    %v1111 = vand.u32 %v1107, 3
    %vm1112 = vcmp.lt.s32.totalorder %v1111, 2
    %vm1113 = vcmp.eq.s32.totalorder %v1111, 0
    %v1114 = vxor.u32 %v1109, 2147483648
    %v1115 = vsel %vm1113, %v1108, %v1114
    %vm1116 = vcmp.eq.s32.totalorder %v1111, 2
    %v1117 = vxor.u32 %v1108, 2147483648
    %v1118 = vsel %vm1116, %v1117, %v1109
    %v1119 = vsel %vm1112, %v1115, %v1118
    %v1120 = vsel %vm1110, nan, %v1119
    %v1121 = vand.u32 2147483647, %v69
    %vm1122 = vcmp.le.f32.partialorder %v1121, 0.7853982
    %vm1123 = vcmp.lt.s32.totalorder %v69, 0
    %v1124 = vand.u32 %v69, 2139095040
    %v1125 = vshrl.u32 %v1124, 23
    %v1126 = vsub.s32 %v1125, 127
    %v1127 = vand.u32 2147483647, %v69
    %v1128 = vand.u32 %v1127, 8388607
    %v1129 = vor.u32 %v1128, 8388608
    %v1130 = vsub.s32 0, %v1129
    %v1131 = vadd.s32 %v1126, 1
    %vm1132 = vcmp.gt.s32.totalorder %v1131, 0
    %v1133 = vsel %vm1132, %v1131, 0
    %v1134 = vshrl.u32 %v1133, 5
    %v1135 = vand.u32 %v1133, 31
    %v1136 = vsub.s32 32, %v1135
    %v1137 = vshrl.u32 683565275, %v1136
    %v1138 = vshll.u32 683565275, %v1135
    %v1139 = vshrl.u32 2475754826, %v1136
    %v1140 = vor.u32 %v1138, %v1139
    %v1141 = vshll.u32 2475754826, %v1135
    %v1142 = vshrl.u32 2131351028, %v1136
    %v1143 = vor.u32 %v1141, %v1142
    %v1144 = vshll.u32 2131351028, %v1135
    %v1145 = vshrl.u32 2102212464, %v1136
    %v1146 = vor.u32 %v1144, %v1145
    %v1147 = vshll.u32 2102212464, %v1135
    %v1148 = vshrl.u32 920167782, %v1136
    %v1149 = vor.u32 %v1147, %v1148
    %v1150 = vshll.u32 920167782, %v1135
    %v1151 = vshrl.u32 1326507024, %v1136
    %v1152 = vor.u32 %v1150, %v1151
    %vm1153 = vcmp.lt.s32.totalorder %v1134, 1
    %vm1154 = vcmp.lt.s32.totalorder %v1134, 2
    %vm1155 = vcmp.lt.s32.totalorder %v1134, 3
    %vm1156 = vcmp.lt.s32.totalorder %v1134, 4
    %v1157 = vsel %vm1153, %v1137, %v1140
    %v1158 = vsel %vm1156, %v1146, 2102212464
    %v1159 = vsel %vm1155, %v1143, %v1158
    %v1160 = vsel %vm1154, %v1157, %v1159
    %v1161 = vsel %vm1153, %v1140, %v1143
    %v1162 = vsel %vm1156, %v1149, 920167782
    %v1163 = vsel %vm1155, %v1146, %v1162
    %v1164 = vsel %vm1154, %v1161, %v1163
    %v1165 = vsel %vm1153, %v1143, %v1146
    %v1166 = vsel %vm1156, %v1152, 1326507024
    %v1167 = vsel %vm1155, %v1149, %v1166
    %v1168 = vsel %vm1154, %v1165, %v1167
    %v1169 = vshll.u32 %v1129, 8
    %v1170 = vmul.u32.u64.compose %v1169, %v1168
    %v1171 = vextract.low.u32 %v1170
    %v1172 = vextract.high.u32 %v1170
    %v1173 = vmul.u32.u64.compose %v1169, %v1164
    %v1174 = vextract.low.u32 %v1173
    %v1175 = vextract.high.u32 %v1173
    %v1176 = vmul.u32 %v1169, %v1160
    %v1177 = vadd.s32 %v1172, %v1174
    %vm1178 = vc.u32 %v1172, %v1174
    %v1179 = vadd.s32 %v1175, 1
    %v1180 = vsel %vm1178, %v1179, %v1175
    %v1181 = vadd.s32 %v1176, %v1180
    %v1182 = vadd.s32 %v1181, 536870912
    %v1183 = vshrl.u32 %v1182, 30
    %v1184 = vshll.u32 %v1183, 30
    %v1185 = vsub.s32 %v1181, %v1184
    %vm1186 = vcmp.lt.s32.totalorder %v1185, 0
    %v1187 = vsub.s32 0, %v1185
    %v1188 = vsel %vm1186, %v1187, %v1185
    %v1189 = vclz %v1188
    %v1190 = vsub.s32 %v1189, 2
    %vm1191 = vcmp.gt.s32.totalorder 0, %v1190
    %v1192 = vsel %vm1191, 0, %v1190
    %v1193 = vsub.s32 32, %v1192
    %v1194 = vshll.u32 %v1185, %v1192
    %v1195 = vshrl.u32 %v1177, %v1193
    %v1196 = vor.u32 %v1194, %v1195
    %v1197 = vsub.s32 4294967266, %v1192
    %v1198 = vadd.s32 %v1197, 127
    %v1199 = vshll.u32 %v1198, 23
    %v1200 = vor.u32 4788187, %v1199
    %v1201 = vand.u32 2147483647, %v1200
    %v1203 = vcvt.s32.f32 %v1196
    %v1204 = vmul.f32 %v1203, %v1201
    %v1205 = vxor.u32 %v1204, 2147483648
    %v1206 = vsel %vm1123, %v1205, %v1204
    %v1207 = vsub.s32 4, %v1183
    %v1208 = vsel %vm1123, %v1207, %v1183
    %v1209 = vsel %vm1122, %v69, %v1206
    %v1210 = vsel %vm1122, 0, %v1208
    %v1211 = vcosq.f32.pop %v1209
    %v1212 = vsinq.f32.pop %v1209
    %vm1213 = vweird.f32 %v69
    %v1214 = vand.u32 %v1210, 3
    %vm1215 = vcmp.lt.s32.totalorder %v1214, 2
    %vm1216 = vcmp.eq.s32.totalorder %v1214, 0
    %v1217 = vxor.u32 %v1212, 2147483648
    %v1218 = vsel %vm1216, %v1211, %v1217
    %vm1219 = vcmp.eq.s32.totalorder %v1214, 2
    %v1220 = vxor.u32 %v1211, 2147483648
    %v1221 = vsel %vm1219, %v1220, %v1212
    %v1222 = vsel %vm1215, %v1218, %v1221
    %v1223 = vsel %vm1213, nan, %v1222
    %v1224 = vand.u32 2147483647, %v70
    %vm1225 = vcmp.le.f32.partialorder %v1224, 0.7853982
    %vm1226 = vcmp.lt.s32.totalorder %v70, 0
    %v1227 = vand.u32 %v70, 2139095040
    %v1228 = vshrl.u32 %v1227, 23
    %v1229 = vsub.s32 %v1228, 127
    %v1230 = vand.u32 2147483647, %v70
    %v1231 = vand.u32 %v1230, 8388607
    %v1232 = vor.u32 %v1231, 8388608
    %v1233 = vsub.s32 0, %v1232
    %v1234 = vadd.s32 %v1229, 1
    %vm1235 = vcmp.gt.s32.totalorder %v1234, 0
    %v1236 = vsel %vm1235, %v1234, 0
    %v1237 = vshrl.u32 %v1236, 5
    %v1238 = vand.u32 %v1236, 31
    %v1239 = vsub.s32 32, %v1238
    %v1240 = vshrl.u32 683565275, %v1239
    %v1241 = vshll.u32 683565275, %v1238
    %v1242 = vshrl.u32 2475754826, %v1239
    %v1243 = vor.u32 %v1241, %v1242
    %v1244 = vshll.u32 2475754826, %v1238
    %v1245 = vshrl.u32 2131351028, %v1239
    %v1246 = vor.u32 %v1244, %v1245
    %v1247 = vshll.u32 2131351028, %v1238
    %v1248 = vshrl.u32 2102212464, %v1239
    %v1249 = vor.u32 %v1247, %v1248
    %v1250 = vshll.u32 2102212464, %v1238
    %v1251 = vshrl.u32 920167782, %v1239
    %v1252 = vor.u32 %v1250, %v1251
    %v1253 = vshll.u32 920167782, %v1238
    %v1254 = vshrl.u32 1326507024, %v1239
    %v1255 = vor.u32 %v1253, %v1254
    %vm1256 = vcmp.lt.s32.totalorder %v1237, 1
    %vm1257 = vcmp.lt.s32.totalorder %v1237, 2
    %vm1258 = vcmp.lt.s32.totalorder %v1237, 3
    %vm1259 = vcmp.lt.s32.totalorder %v1237, 4
    %v1260 = vsel %vm1256, %v1240, %v1243
    %v1261 = vsel %vm1259, %v1249, 2102212464
    %v1262 = vsel %vm1258, %v1246, %v1261
    %v1263 = vsel %vm1257, %v1260, %v1262
    %v1264 = vsel %vm1256, %v1243, %v1246
    %v1265 = vsel %vm1259, %v1252, 920167782
    %v1266 = vsel %vm1258, %v1249, %v1265
    %v1267 = vsel %vm1257, %v1264, %v1266
    %v1268 = vsel %vm1256, %v1246, %v1249
    %v1269 = vsel %vm1259, %v1255, 1326507024
    %v1270 = vsel %vm1258, %v1252, %v1269
    %v1271 = vsel %vm1257, %v1268, %v1270
    %v1272 = vshll.u32 %v1232, 8
    %v1273 = vmul.u32.u64.compose %v1272, %v1271
    %v1274 = vextract.low.u32 %v1273
    %v1275 = vextract.high.u32 %v1273
    %v1276 = vmul.u32.u64.compose %v1272, %v1267
    %v1277 = vextract.low.u32 %v1276
    %v1278 = vextract.high.u32 %v1276
    %v1279 = vmul.u32 %v1272, %v1263
    %v1280 = vadd.s32 %v1275, %v1277
    %vm1281 = vc.u32 %v1275, %v1277
    %v1282 = vadd.s32 %v1278, 1
    %v1283 = vsel %vm1281, %v1282, %v1278
    %v1284 = vadd.s32 %v1279, %v1283
    %v1285 = vadd.s32 %v1284, 536870912
    %v1286 = vshrl.u32 %v1285, 30
    %v1287 = vshll.u32 %v1286, 30
    %v1288 = vsub.s32 %v1284, %v1287
    %vm1289 = vcmp.lt.s32.totalorder %v1288, 0
    %v1290 = vsub.s32 0, %v1288
    %v1291 = vsel %vm1289, %v1290, %v1288
    %v1292 = vclz %v1291
    %v1293 = vsub.s32 %v1292, 2
    %vm1294 = vcmp.gt.s32.totalorder 0, %v1293
    %v1295 = vsel %vm1294, 0, %v1293
    %v1296 = vsub.s32 32, %v1295
    %v1297 = vshll.u32 %v1288, %v1295
    %v1298 = vshrl.u32 %v1280, %v1296
    %v1299 = vor.u32 %v1297, %v1298
    %v1300 = vsub.s32 4294967266, %v1295
    %v1301 = vadd.s32 %v1300, 127
    %v1302 = vshll.u32 %v1301, 23
    %v1303 = vor.u32 4788187, %v1302
    %v1304 = vand.u32 2147483647, %v1303
    %v1306 = vcvt.s32.f32 %v1299
    %v1307 = vmul.f32 %v1306, %v1304
    %v1308 = vxor.u32 %v1307, 2147483648
    %v1309 = vsel %vm1226, %v1308, %v1307
    %v1310 = vsub.s32 4, %v1286
    %v1311 = vsel %vm1226, %v1310, %v1286
    %v1312 = vsel %vm1225, %v70, %v1309
    %v1313 = vsel %vm1225, 0, %v1311
    %v1314 = vcosq.f32.pop %v1312
    %v1315 = vsinq.f32.pop %v1312
    %vm1316 = vweird.f32 %v70
    %v1317 = vand.u32 %v1313, 3
    %vm1318 = vcmp.lt.s32.totalorder %v1317, 2
    %vm1319 = vcmp.eq.s32.totalorder %v1317, 0
    %v1320 = vxor.u32 %v1315, 2147483648
    %v1321 = vsel %vm1319, %v1314, %v1320
    %vm1322 = vcmp.eq.s32.totalorder %v1317, 2
    %v1323 = vxor.u32 %v1314, 2147483648
    %v1324 = vsel %vm1322, %v1323, %v1315
    %v1325 = vsel %vm1318, %v1321, %v1324
    %v1326 = vsel %vm1316, nan, %v1325
    %v1327 = vand.u32 2147483647, %v71
    %vm1328 = vcmp.le.f32.partialorder %v1327, 0.7853982
    %vm1329 = vcmp.lt.s32.totalorder %v71, 0
    %v1330 = vand.u32 %v71, 2139095040
    %v1331 = vshrl.u32 %v1330, 23
    %v1332 = vsub.s32 %v1331, 127
    %v1333 = vand.u32 2147483647, %v71
    %v1334 = vand.u32 %v1333, 8388607
    %v1335 = vor.u32 %v1334, 8388608
    %v1336 = vsub.s32 0, %v1335
    %v1337 = vadd.s32 %v1332, 1
    %vm1338 = vcmp.gt.s32.totalorder %v1337, 0
    %v1339 = vsel %vm1338, %v1337, 0
    %v1340 = vshrl.u32 %v1339, 5
    %v1341 = vand.u32 %v1339, 31
    %v1342 = vsub.s32 32, %v1341
    %v1343 = vshrl.u32 683565275, %v1342
    %v1344 = vshll.u32 683565275, %v1341
    %v1345 = vshrl.u32 2475754826, %v1342
    %v1346 = vor.u32 %v1344, %v1345
    %v1347 = vshll.u32 2475754826, %v1341
    %v1348 = vshrl.u32 2131351028, %v1342
    %v1349 = vor.u32 %v1347, %v1348
    %v1350 = vshll.u32 2131351028, %v1341
    %v1351 = vshrl.u32 2102212464, %v1342
    %v1352 = vor.u32 %v1350, %v1351
    %v1353 = vshll.u32 2102212464, %v1341
    %v1354 = vshrl.u32 920167782, %v1342
    %v1355 = vor.u32 %v1353, %v1354
    %v1356 = vshll.u32 920167782, %v1341
    %v1357 = vshrl.u32 1326507024, %v1342
    %v1358 = vor.u32 %v1356, %v1357
    %vm1359 = vcmp.lt.s32.totalorder %v1340, 1
    %vm1360 = vcmp.lt.s32.totalorder %v1340, 2
    %vm1361 = vcmp.lt.s32.totalorder %v1340, 3
    %vm1362 = vcmp.lt.s32.totalorder %v1340, 4
    %v1363 = vsel %vm1359, %v1343, %v1346
    %v1364 = vsel %vm1362, %v1352, 2102212464
    %v1365 = vsel %vm1361, %v1349, %v1364
    %v1366 = vsel %vm1360, %v1363, %v1365
    %v1367 = vsel %vm1359, %v1346, %v1349
    %v1368 = vsel %vm1362, %v1355, 920167782
    %v1369 = vsel %vm1361, %v1352, %v1368
    %v1370 = vsel %vm1360, %v1367, %v1369
    %v1371 = vsel %vm1359, %v1349, %v1352
    %v1372 = vsel %vm1362, %v1358, 1326507024
    %v1373 = vsel %vm1361, %v1355, %v1372
    %v1374 = vsel %vm1360, %v1371, %v1373
    %v1375 = vshll.u32 %v1335, 8
    %v1376 = vmul.u32.u64.compose %v1375, %v1374
    %v1377 = vextract.low.u32 %v1376
    %v1378 = vextract.high.u32 %v1376
    %v1379 = vmul.u32.u64.compose %v1375, %v1370
    %v1380 = vextract.low.u32 %v1379
    %v1381 = vextract.high.u32 %v1379
    %v1382 = vmul.u32 %v1375, %v1366
    %v1383 = vadd.s32 %v1378, %v1380
    %vm1384 = vc.u32 %v1378, %v1380
    %v1385 = vadd.s32 %v1381, 1
    %v1386 = vsel %vm1384, %v1385, %v1381
    %v1387 = vadd.s32 %v1382, %v1386
    %v1388 = vadd.s32 %v1387, 536870912
    %v1389 = vshrl.u32 %v1388, 30
    %v1390 = vshll.u32 %v1389, 30
    %v1391 = vsub.s32 %v1387, %v1390
    %vm1392 = vcmp.lt.s32.totalorder %v1391, 0
    %v1393 = vsub.s32 0, %v1391
    %v1394 = vsel %vm1392, %v1393, %v1391
    %v1395 = vclz %v1394
    %v1396 = vsub.s32 %v1395, 2
    %vm1397 = vcmp.gt.s32.totalorder 0, %v1396
    %v1398 = vsel %vm1397, 0, %v1396
    %v1399 = vsub.s32 32, %v1398
    %v1400 = vshll.u32 %v1391, %v1398
    %v1401 = vshrl.u32 %v1383, %v1399
    %v1402 = vor.u32 %v1400, %v1401
    %v1403 = vsub.s32 4294967266, %v1398
    %v1404 = vadd.s32 %v1403, 127
    %v1405 = vshll.u32 %v1404, 23
    %v1406 = vor.u32 4788187, %v1405
    %v1407 = vand.u32 2147483647, %v1406
    %v1409 = vcvt.s32.f32 %v1402
    %v1410 = vmul.f32 %v1409, %v1407
    %v1411 = vxor.u32 %v1410, 2147483648
    %v1412 = vsel %vm1329, %v1411, %v1410
    %v1413 = vsub.s32 4, %v1389
    %v1414 = vsel %vm1329, %v1413, %v1389
    %v1415 = vsel %vm1328, %v71, %v1412
    %v1416 = vsel %vm1328, 0, %v1414
    %v1417 = vcosq.f32.pop %v1415
    %v1418 = vsinq.f32.pop %v1415
    %vm1419 = vweird.f32 %v71
    %v1420 = vand.u32 %v1416, 3
    %vm1421 = vcmp.lt.s32.totalorder %v1420, 2
    %vm1422 = vcmp.eq.s32.totalorder %v1420, 0
    %v1423 = vxor.u32 %v1418, 2147483648
    %v1424 = vsel %vm1422, %v1417, %v1423
    %vm1425 = vcmp.eq.s32.totalorder %v1420, 2
    %v1426 = vxor.u32 %v1417, 2147483648
    %v1427 = vsel %vm1425, %v1426, %v1418
    %v1428 = vsel %vm1421, %v1424, %v1427
    %v1429 = vsel %vm1419, nan, %v1428
    %v1430 = vand.u32 2147483647, %v72
    %vm1431 = vcmp.le.f32.partialorder %v1430, 0.7853982
    %vm1432 = vcmp.lt.s32.totalorder %v72, 0
    %v1433 = vand.u32 %v72, 2139095040
    %v1434 = vshrl.u32 %v1433, 23
    %v1435 = vsub.s32 %v1434, 127
    %v1436 = vand.u32 2147483647, %v72
    %v1437 = vand.u32 %v1436, 8388607
    %v1438 = vor.u32 %v1437, 8388608
    %v1439 = vsub.s32 0, %v1438
    %v1440 = vadd.s32 %v1435, 1
    %vm1441 = vcmp.gt.s32.totalorder %v1440, 0
    %v1442 = vsel %vm1441, %v1440, 0
    %v1443 = vshrl.u32 %v1442, 5
    %v1444 = vand.u32 %v1442, 31
    %v1445 = vsub.s32 32, %v1444
    %v1446 = vshrl.u32 683565275, %v1445
    %v1447 = vshll.u32 683565275, %v1444
    %v1448 = vshrl.u32 2475754826, %v1445
    %v1449 = vor.u32 %v1447, %v1448
    %v1450 = vshll.u32 2475754826, %v1444
    %v1451 = vshrl.u32 2131351028, %v1445
    %v1452 = vor.u32 %v1450, %v1451
    %v1453 = vshll.u32 2131351028, %v1444
    %v1454 = vshrl.u32 2102212464, %v1445
    %v1455 = vor.u32 %v1453, %v1454
    %v1456 = vshll.u32 2102212464, %v1444
    %v1457 = vshrl.u32 920167782, %v1445
    %v1458 = vor.u32 %v1456, %v1457
    %v1459 = vshll.u32 920167782, %v1444
    %v1460 = vshrl.u32 1326507024, %v1445
    %v1461 = vor.u32 %v1459, %v1460
    %vm1462 = vcmp.lt.s32.totalorder %v1443, 1
    %vm1463 = vcmp.lt.s32.totalorder %v1443, 2
    %vm1464 = vcmp.lt.s32.totalorder %v1443, 3
    %vm1465 = vcmp.lt.s32.totalorder %v1443, 4
    %v1466 = vsel %vm1462, %v1446, %v1449
    %v1467 = vsel %vm1465, %v1455, 2102212464
    %v1468 = vsel %vm1464, %v1452, %v1467
    %v1469 = vsel %vm1463, %v1466, %v1468
    %v1470 = vsel %vm1462, %v1449, %v1452
    %v1471 = vsel %vm1465, %v1458, 920167782
    %v1472 = vsel %vm1464, %v1455, %v1471
    %v1473 = vsel %vm1463, %v1470, %v1472
    %v1474 = vsel %vm1462, %v1452, %v1455
    %v1475 = vsel %vm1465, %v1461, 1326507024
    %v1476 = vsel %vm1464, %v1458, %v1475
    %v1477 = vsel %vm1463, %v1474, %v1476
    %v1478 = vshll.u32 %v1438, 8
    %v1479 = vmul.u32.u64.compose %v1478, %v1477
    %v1480 = vextract.low.u32 %v1479
    %v1481 = vextract.high.u32 %v1479
    %v1482 = vmul.u32.u64.compose %v1478, %v1473
    %v1483 = vextract.low.u32 %v1482
    %v1484 = vextract.high.u32 %v1482
    %v1485 = vmul.u32 %v1478, %v1469
    %v1486 = vadd.s32 %v1481, %v1483
    %vm1487 = vc.u32 %v1481, %v1483
    %v1488 = vadd.s32 %v1484, 1
    %v1489 = vsel %vm1487, %v1488, %v1484
    %v1490 = vadd.s32 %v1485, %v1489
    %v1491 = vadd.s32 %v1490, 536870912
    %v1492 = vshrl.u32 %v1491, 30
    %v1493 = vshll.u32 %v1492, 30
    %v1494 = vsub.s32 %v1490, %v1493
    %vm1495 = vcmp.lt.s32.totalorder %v1494, 0
    %v1496 = vsub.s32 0, %v1494
    %v1497 = vsel %vm1495, %v1496, %v1494
    %v1498 = vclz %v1497
    %v1499 = vsub.s32 %v1498, 2
    %vm1500 = vcmp.gt.s32.totalorder 0, %v1499
    %v1501 = vsel %vm1500, 0, %v1499
    %v1502 = vsub.s32 32, %v1501
    %v1503 = vshll.u32 %v1494, %v1501
    %v1504 = vshrl.u32 %v1486, %v1502
    %v1505 = vor.u32 %v1503, %v1504
    %v1506 = vsub.s32 4294967266, %v1501
    %v1507 = vadd.s32 %v1506, 127
    %v1508 = vshll.u32 %v1507, 23
    %v1509 = vor.u32 4788187, %v1508
    %v1510 = vand.u32 2147483647, %v1509
    %v1512 = vcvt.s32.f32 %v1505
    %v1513 = vmul.f32 %v1512, %v1510
    %v1514 = vxor.u32 %v1513, 2147483648
    %v1515 = vsel %vm1432, %v1514, %v1513
    %v1516 = vsub.s32 4, %v1492
    %v1517 = vsel %vm1432, %v1516, %v1492
    %v1518 = vsel %vm1431, %v72, %v1515
    %v1519 = vsel %vm1431, 0, %v1517
    %v1520 = vcosq.f32.pop %v1518
    %v1521 = vsinq.f32.pop %v1518
    %vm1522 = vweird.f32 %v72
    %v1523 = vand.u32 %v1519, 3
    %vm1524 = vcmp.lt.s32.totalorder %v1523, 2
    %vm1525 = vcmp.eq.s32.totalorder %v1523, 0
    %v1526 = vxor.u32 %v1521, 2147483648
    %v1527 = vsel %vm1525, %v1520, %v1526
    %vm1528 = vcmp.eq.s32.totalorder %v1523, 2
    %v1529 = vxor.u32 %v1520, 2147483648
    %v1530 = vsel %vm1528, %v1529, %v1521
    %v1531 = vsel %vm1524, %v1527, %v1530
    %v1532 = vsel %vm1522, nan, %v1531
    %v1533 = vand.u32 2147483647, %v73
    %vm1534 = vcmp.le.f32.partialorder %v1533, 0.7853982
    %vm1535 = vcmp.lt.s32.totalorder %v73, 0
    %v1536 = vand.u32 %v73, 2139095040
    %v1537 = vshrl.u32 %v1536, 23
    %v1538 = vsub.s32 %v1537, 127
    %v1539 = vand.u32 2147483647, %v73
    %v1540 = vand.u32 %v1539, 8388607
    %v1541 = vor.u32 %v1540, 8388608
    %v1542 = vsub.s32 0, %v1541
    %v1543 = vadd.s32 %v1538, 1
    %vm1544 = vcmp.gt.s32.totalorder %v1543, 0
    %v1545 = vsel %vm1544, %v1543, 0
    %v1546 = vshrl.u32 %v1545, 5
    %v1547 = vand.u32 %v1545, 31
    %v1548 = vsub.s32 32, %v1547
    %v1549 = vshrl.u32 683565275, %v1548
    %v1550 = vshll.u32 683565275, %v1547
    %v1551 = vshrl.u32 2475754826, %v1548
    %v1552 = vor.u32 %v1550, %v1551
    %v1553 = vshll.u32 2475754826, %v1547
    %v1554 = vshrl.u32 2131351028, %v1548
    %v1555 = vor.u32 %v1553, %v1554
    %v1556 = vshll.u32 2131351028, %v1547
    %v1557 = vshrl.u32 2102212464, %v1548
    %v1558 = vor.u32 %v1556, %v1557
    %v1559 = vshll.u32 2102212464, %v1547
    %v1560 = vshrl.u32 920167782, %v1548
    %v1561 = vor.u32 %v1559, %v1560
    %v1562 = vshll.u32 920167782, %v1547
    %v1563 = vshrl.u32 1326507024, %v1548
    %v1564 = vor.u32 %v1562, %v1563
    %vm1565 = vcmp.lt.s32.totalorder %v1546, 1
    %vm1566 = vcmp.lt.s32.totalorder %v1546, 2
    %vm1567 = vcmp.lt.s32.totalorder %v1546, 3
    %vm1568 = vcmp.lt.s32.totalorder %v1546, 4
    %v1569 = vsel %vm1565, %v1549, %v1552
    %v1570 = vsel %vm1568, %v1558, 2102212464
    %v1571 = vsel %vm1567, %v1555, %v1570
    %v1572 = vsel %vm1566, %v1569, %v1571
    %v1573 = vsel %vm1565, %v1552, %v1555
    %v1574 = vsel %vm1568, %v1561, 920167782
    %v1575 = vsel %vm1567, %v1558, %v1574
    %v1576 = vsel %vm1566, %v1573, %v1575
    %v1577 = vsel %vm1565, %v1555, %v1558
    %v1578 = vsel %vm1568, %v1564, 1326507024
    %v1579 = vsel %vm1567, %v1561, %v1578
    %v1580 = vsel %vm1566, %v1577, %v1579
    %v1581 = vshll.u32 %v1541, 8
    %v1582 = vmul.u32.u64.compose %v1581, %v1580
    %v1583 = vextract.low.u32 %v1582
    %v1584 = vextract.high.u32 %v1582
    %v1585 = vmul.u32.u64.compose %v1581, %v1576
    %v1586 = vextract.low.u32 %v1585
    %v1587 = vextract.high.u32 %v1585
    %v1588 = vmul.u32 %v1581, %v1572
    %v1589 = vadd.s32 %v1584, %v1586
    %vm1590 = vc.u32 %v1584, %v1586
    %v1591 = vadd.s32 %v1587, 1
    %v1592 = vsel %vm1590, %v1591, %v1587
    %v1593 = vadd.s32 %v1588, %v1592
    %v1594 = vadd.s32 %v1593, 536870912
    %v1595 = vshrl.u32 %v1594, 30
    %v1596 = vshll.u32 %v1595, 30
    %v1597 = vsub.s32 %v1593, %v1596
    %vm1598 = vcmp.lt.s32.totalorder %v1597, 0
    %v1599 = vsub.s32 0, %v1597
    %v1600 = vsel %vm1598, %v1599, %v1597
    %v1601 = vclz %v1600
    %v1602 = vsub.s32 %v1601, 2
    %vm1603 = vcmp.gt.s32.totalorder 0, %v1602
    %v1604 = vsel %vm1603, 0, %v1602
    %v1605 = vsub.s32 32, %v1604
    %v1606 = vshll.u32 %v1597, %v1604
    %v1607 = vshrl.u32 %v1589, %v1605
    %v1608 = vor.u32 %v1606, %v1607
    %v1609 = vsub.s32 4294967266, %v1604
    %v1610 = vadd.s32 %v1609, 127
    %v1611 = vshll.u32 %v1610, 23
    %v1612 = vor.u32 4788187, %v1611
    %v1613 = vand.u32 2147483647, %v1612
    %v1615 = vcvt.s32.f32 %v1608
    %v1616 = vmul.f32 %v1615, %v1613
    %v1617 = vxor.u32 %v1616, 2147483648
    %v1618 = vsel %vm1535, %v1617, %v1616
    %v1619 = vsub.s32 4, %v1595
    %v1620 = vsel %vm1535, %v1619, %v1595
    %v1621 = vsel %vm1534, %v73, %v1618
    %v1622 = vsel %vm1534, 0, %v1620
    %v1623 = vcosq.f32.pop %v1621
    %v1624 = vsinq.f32.pop %v1621
    %vm1625 = vweird.f32 %v73
    %v1626 = vand.u32 %v1622, 3
    %vm1627 = vcmp.lt.s32.totalorder %v1626, 2
    %vm1628 = vcmp.eq.s32.totalorder %v1626, 0
    %v1629 = vxor.u32 %v1624, 2147483648
    %v1630 = vsel %vm1628, %v1623, %v1629
    %vm1631 = vcmp.eq.s32.totalorder %v1626, 2
    %v1632 = vxor.u32 %v1623, 2147483648
    %v1633 = vsel %vm1631, %v1632, %v1624
    %v1634 = vsel %vm1627, %v1630, %v1633
    %v1635 = vsel %vm1625, nan, %v1634
    %v1636 = vand.u32 2147483647, %v74
    %vm1637 = vcmp.le.f32.partialorder %v1636, 0.7853982
    %vm1638 = vcmp.lt.s32.totalorder %v74, 0
    %v1639 = vand.u32 %v74, 2139095040
    %v1640 = vshrl.u32 %v1639, 23
    %v1641 = vsub.s32 %v1640, 127
    %v1642 = vand.u32 2147483647, %v74
    %v1643 = vand.u32 %v1642, 8388607
    %v1644 = vor.u32 %v1643, 8388608
    %v1645 = vsub.s32 0, %v1644
    %v1646 = vadd.s32 %v1641, 1
    %vm1647 = vcmp.gt.s32.totalorder %v1646, 0
    %v1648 = vsel %vm1647, %v1646, 0
    %v1649 = vshrl.u32 %v1648, 5
    %v1650 = vand.u32 %v1648, 31
    %v1651 = vsub.s32 32, %v1650
    %v1652 = vshrl.u32 683565275, %v1651
    %v1653 = vshll.u32 683565275, %v1650
    %v1654 = vshrl.u32 2475754826, %v1651
    %v1655 = vor.u32 %v1653, %v1654
    %v1656 = vshll.u32 2475754826, %v1650
    %v1657 = vshrl.u32 2131351028, %v1651
    %v1658 = vor.u32 %v1656, %v1657
    %v1659 = vshll.u32 2131351028, %v1650
    %v1660 = vshrl.u32 2102212464, %v1651
    %v1661 = vor.u32 %v1659, %v1660
    %v1662 = vshll.u32 2102212464, %v1650
    %v1663 = vshrl.u32 920167782, %v1651
    %v1664 = vor.u32 %v1662, %v1663
    %v1665 = vshll.u32 920167782, %v1650
    %v1666 = vshrl.u32 1326507024, %v1651
    %v1667 = vor.u32 %v1665, %v1666
    %vm1668 = vcmp.lt.s32.totalorder %v1649, 1
    %vm1669 = vcmp.lt.s32.totalorder %v1649, 2
    %vm1670 = vcmp.lt.s32.totalorder %v1649, 3
    %vm1671 = vcmp.lt.s32.totalorder %v1649, 4
    %v1672 = vsel %vm1668, %v1652, %v1655
    %v1673 = vsel %vm1671, %v1661, 2102212464
    %v1674 = vsel %vm1670, %v1658, %v1673
    %v1675 = vsel %vm1669, %v1672, %v1674
    %v1676 = vsel %vm1668, %v1655, %v1658
    %v1677 = vsel %vm1671, %v1664, 920167782
    %v1678 = vsel %vm1670, %v1661, %v1677
    %v1679 = vsel %vm1669, %v1676, %v1678
    %v1680 = vsel %vm1668, %v1658, %v1661
    %v1681 = vsel %vm1671, %v1667, 1326507024
    %v1682 = vsel %vm1670, %v1664, %v1681
    %v1683 = vsel %vm1669, %v1680, %v1682
    %v1684 = vshll.u32 %v1644, 8
    %v1685 = vmul.u32.u64.compose %v1684, %v1683
    %v1686 = vextract.low.u32 %v1685
    %v1687 = vextract.high.u32 %v1685
    %v1688 = vmul.u32.u64.compose %v1684, %v1679
    %v1689 = vextract.low.u32 %v1688
    %v1690 = vextract.high.u32 %v1688
    %v1691 = vmul.u32 %v1684, %v1675
    %v1692 = vadd.s32 %v1687, %v1689
    %vm1693 = vc.u32 %v1687, %v1689
    %v1694 = vadd.s32 %v1690, 1
    %v1695 = vsel %vm1693, %v1694, %v1690
    %v1696 = vadd.s32 %v1691, %v1695
    %v1697 = vadd.s32 %v1696, 536870912
    %v1698 = vshrl.u32 %v1697, 30
    %v1699 = vshll.u32 %v1698, 30
    %v1700 = vsub.s32 %v1696, %v1699
    %vm1701 = vcmp.lt.s32.totalorder %v1700, 0
    %v1702 = vsub.s32 0, %v1700
    %v1703 = vsel %vm1701, %v1702, %v1700
    %v1704 = vclz %v1703
    %v1705 = vsub.s32 %v1704, 2
    %vm1706 = vcmp.gt.s32.totalorder 0, %v1705
    %v1707 = vsel %vm1706, 0, %v1705
    %v1708 = vsub.s32 32, %v1707
    %v1709 = vshll.u32 %v1700, %v1707
    %v1710 = vshrl.u32 %v1692, %v1708
    %v1711 = vor.u32 %v1709, %v1710
    %v1712 = vsub.s32 4294967266, %v1707
    %v1713 = vadd.s32 %v1712, 127
    %v1714 = vshll.u32 %v1713, 23
    %v1715 = vor.u32 4788187, %v1714
    %v1716 = vand.u32 2147483647, %v1715
    %v1718 = vcvt.s32.f32 %v1711
    %v1719 = vmul.f32 %v1718, %v1716
    %v1720 = vxor.u32 %v1719, 2147483648
    %v1721 = vsel %vm1638, %v1720, %v1719
    %v1722 = vsub.s32 4, %v1698
    %v1723 = vsel %vm1638, %v1722, %v1698
    %v1724 = vsel %vm1637, %v74, %v1721
    %v1725 = vsel %vm1637, 0, %v1723
    %v1726 = vcosq.f32.pop %v1724
    %v1727 = vsinq.f32.pop %v1724
    %vm1728 = vweird.f32 %v74
    %v1729 = vand.u32 %v1725, 3
    %vm1730 = vcmp.lt.s32.totalorder %v1729, 2
    %vm1731 = vcmp.eq.s32.totalorder %v1729, 0
    %v1732 = vxor.u32 %v1727, 2147483648
    %v1733 = vsel %vm1731, %v1726, %v1732
    %vm1734 = vcmp.eq.s32.totalorder %v1729, 2
    %v1735 = vxor.u32 %v1726, 2147483648
    %v1736 = vsel %vm1734, %v1735, %v1727
    %v1737 = vsel %vm1730, %v1733, %v1736
    %v1738 = vsel %vm1728, nan, %v1737
    %1739 = vst [vmem:[#allocation2 + $0x8] sm:$0xff] %v1017
    %1740 = vst [vmem:[#allocation2 + $0x18] sm:$0xff] %v1120
    %1741 = vst [vmem:[#allocation2 + $0x28] sm:$0xff] %v1223
    %1742 = vst [vmem:[#allocation2 + $0x38] sm:$0xff] %v1326
    %1743 = vst [vmem:[#allocation2 + $0x48] sm:$0xff] %v1429
    %1744 = vst [vmem:[#allocation2 + $0x58] sm:$0xff] %v1532
    %1745 = vst [vmem:[#allocation2 + $0x68] sm:$0xff] %v1635
    %1746 = vst [vmem:[#allocation2 + $0x78] sm:$0xff] %v1738
    // Predicated region
    $region10: #{tpu_custom_call.1} parent=1 // pred_check
      _
    $region11: #{tpu_custom_call.1} parent=1 // pred_check_branch
      %1748 = sbr.rel (0) target = $region13
    $region12: #{tpu_custom_call.1} parent=1 // pred_region
      %s1750 = ssub.s32 2048, 2048
      %1751 = vsyncadd [#allocation3], %s1750
      %s1752 = sshll.u32 [#allocation2], 4
      %s1753 = int_to_ptr.vmem [resolvable:$true] %s1752
      %1758 = dma.vmem_to_hbm [thread:$0]  %s1753, 2048, %s2, [#allocation3], 256, 256, 16
    $region13: #{tpu_custom_call.1} parent=1 // pred_fallthru
      _
    // Predicated region
    $region14: #{tpu_custom_call.1} parent=1 // pred_check
      _
    $region15: #{tpu_custom_call.1} parent=1 // pred_check_branch
      %1760 = sbr.rel (0) target = $region17
    $region16: #{tpu_custom_call.1} parent=1 // pred_region
      %1761 = dma.done [#allocation3], 2048
    $region17: #{tpu_custom_call.1} parent=1 // pred_fallthru
      _
    %1762 = vsyncpa [#allocation3], 1

</llo_original>
